<compile_context>
chip_gen: v5e
topology: v5e:2x2
jax: 0.10.0
libtpu: 0.0.40
codegen_flags: <defaults>
</compile_context>

<pallas_src>
import functools
import numpy as np
import jax
import jax.numpy as jnp
from jax.experimental import pallas as pl
from jax.experimental.pallas import tpu as pltpu


# ---------------------------------------------------------------------------
# Small helpers
# ---------------------------------------------------------------------------
def _round_up(x, m):
    return (x + m - 1) // m * m


def _pick_batch_tile(batch):
    """Pick (TB, Bp): TB multiple of 16, minimal padding, >=2 grid steps if possible."""
    tb = 16
    for cand in (128, 64, 32, 16):
        if _round_up(batch, cand) - batch <= max(16, batch // 8):
            tb = cand
            break
    bp = _round_up(batch, tb)
    if bp // tb < 2 and tb > 16:     # give both v7x TensorCores some work
        tb //= 2
        bp = _round_up(batch, tb)
    return tb, bp


def _tb_from_bp(bp):
    """Batch tile for an already-padded batch Bp (Bp % 16 == 0)."""
    for cand in (128, 64, 32, 16):
        if bp % cand == 0 and bp // cand >= 2:
            return cand
    for cand in (128, 64, 32, 16):
        if bp % cand == 0:
            return cand
    return 16


def _default_transcendental_dtype():
    """bf16 sigmoid/tanh on v6e/v7x (bf16 VPU/EUP); f32 on v5e and older."""
    try:
        kind = jax.devices()[0].device_kind.lower()
    except Exception:
        return jnp.float32
    for tag in ("v2", "v3", "v4", "v5"):
        if tag in kind:
            return jnp.float32
    return jnp.bfloat16


# ---------------------------------------------------------------------------
# Kernel
# ---------------------------------------------------------------------------
def _calstm_kernel(hl_ref, hp_ref, cl_ref, cp_ref,
                   wl_ref, wp_ref, b_ref, cpcoef_ref, clcoef_ref,
                   h_out, c_out, gfp_out, gfl_out, go_out, *, hpad, ew_dtype):
    Hp = hpad
    f32 = jnp.float32

    # Two MXU dots (bf16 in, f32 accumulate) -- no concat, no intermediate buffer.
    gates = (jnp.dot(hl_ref[...], wl_ref[...], preferred_element_type=f32)
             + jnp.dot(hp_ref[...], wp_ref[...], preferred_element_type=f32)
             + b_ref[...])

    # Transcendentals in bf16 on v6e/v7x (ew_dtype), f32 on v5e (no-op cast there).
    g = gates.astype(ew_dtype)

    # Lane-aligned static slices (each gate block is Hp = multiple of 128 wide).
    i_g     = g[:, 0 * Hp:1 * Hp]
    f_prev  = g[:, 1 * Hp:2 * Hp]   # "+1" already folded into the bias
    f_lower = g[:, 2 * Hp:3 * Hp]   # "+1" already folded into the bias
    u_g     = g[:, 3 * Hp:4 * Hp]
    o_g     = g[:, 4 * Hp:5 * Hp]

    sig_fp = jax.nn.sigmoid(f_prev)
    sig_fl = jax.nn.sigmoid(f_lower)
    sig_o  = jax.nn.sigmoid(o_g)
    sig_i  = jax.nn.sigmoid(i_g)
    tanh_u = jnp.tanh(u_g)

    # Cell-state update accumulates in f32 (stays f32 across the recurrence).
    c = (cpcoef_ref[...] * (cp_ref[...] * sig_fp.astype(f32))
         + clcoef_ref[...] * (cl_ref[...] * sig_fl.astype(f32))
         + tanh_u.astype(f32) * sig_i.astype(f32))
    h = sig_o * jnp.tanh(c.astype(ew_dtype))

    h_out[...] = h.astype(h_out.dtype)          # bf16: next step's MXU input dtype
    c_out[...] = c                              # f32 cell state
    gfp_out[...] = sig_fp.astype(gfp_out.dtype)
    gfl_out[...] = sig_fl.astype(gfl_out.dtype)
    go_out[...] = sig_o.astype(go_out.dtype)


# ---------------------------------------------------------------------------
# Parameter preparation (one-time, outside the per-step call path)
# ---------------------------------------------------------------------------
def _fuse_weights(fuse_type, hidden, forget_weight=None):
    """Per-feature (w_prev, w_lower) of shape (1, hidden)."""
    ones = jnp.ones((1, hidden), jnp.float32)
    if fuse_type == 'add':
        return ones, ones
    if fuse_type == 'avg':
        return 0.5 * ones, 0.5 * ones
    if fuse_type == 'param':
        w = jax.nn.sigmoid(forget_weight.reshape(1, hidden).astype(jnp.float32))
        return w, 1.0 - w
    lam = 1.0 - float(fuse_type)   # covers False (lam=1) and numeric fuse_type
    return lam * ones, (1.0 - lam) * ones


def prepare_calstm_params(weight, bias, hidden, fuse_type=False, forget_weight=None,
                          transcendental_dtype=None):
    """Pre-transpose / pad / bf16-cast weights; fold +1 forget bias; build fuse coefs.

    weight: (5H, 2H) PyTorch nn.Linear layout.  bias: (5H,).
    Returns a dict of kernel-ready arrays:
      w_low, w_prev : (Hp, 5*Hp) bf16   (rows = h_lower / h_prev inputs)
      bias          : (1, 5*Hp) f32     (+1 folded into the two forget-gate blocks)
      coef_prev/low : (1, Hp)   f32
    """
    H = hidden
    Hp = _round_up(H, 128)

    w_t = jnp.transpose(weight).astype(jnp.float32)   # (2H, 5H): rows 0:H=h_lower, H:2H=h_prev
    w_low, w_prev = w_t[:H], w_t[H:]

    def pad_gate_cols(w):  # (H, 5H) -> (Hp, 5*Hp), each gate block lane-aligned
        blocks = [jnp.pad(w[:, k * H:(k + 1) * H], ((0, Hp - H), (0, Hp - H)))
                  for k in range(5)]
        return jnp.concatenate(blocks, axis=1)

    w_low_p = pad_gate_cols(w_low).astype(jnp.bfloat16)
    w_prev_p = pad_gate_cols(w_prev).astype(jnp.bfloat16)

    b = bias.astype(jnp.float32)
    b_blocks = []
    for k in range(5):
        bk = b[k * H:(k + 1) * H]
        if k in (1, 2):            # f_prev, f_lower: fold the "+1" in here
            bk = bk + 1.0
        b_blocks.append(jnp.pad(bk, (0, Hp - H)))
    b_p = jnp.concatenate(b_blocks).reshape(1, 5 * Hp)

    coef_prev, coef_low = _fuse_weights(fuse_type, H, forget_weight)
    coef_prev = jnp.pad(coef_prev, ((0, 0), (0, Hp - H)))
    coef_low = jnp.pad(coef_low, ((0, 0), (0, Hp - H)))

    ew = (transcendental_dtype if transcendental_dtype is not None
          else _default_transcendental_dtype())

    return dict(H=H, Hp=Hp, w_low=w_low_p, w_prev=w_prev_p, bias=b_p,
                coef_prev=coef_prev, coef_low=coef_low, ew_dtype=ew)


# ---------------------------------------------------------------------------
# Padded-layout core (use this inside recurrent loops)
# ---------------------------------------------------------------------------
def pad_calstm_state(h, c, params, batch_pad=None):
    """Pad (B,H) state once into kernel layout: (Bp,Hp) with h -> bf16, c -> f32."""
    H, Hp = params['H'], params['Hp']
    B = h.shape[0]
    Bp = batch_pad if batch_pad is not None else _pick_batch_tile(B)[1]
    h_p = jnp.pad(h.astype(jnp.bfloat16), ((0, Bp - B), (0, Hp - H)))
    c_p = jnp.pad(c.astype(jnp.float32), ((0, Bp - B), (0, Hp - H)))
    return h_p, c_p


def unpad_calstm_out(x, params, batch):
    """Slice a padded (Bp,Hp) kernel output back to (B,H) f32."""
    return x[:batch, :params['H']].astype(jnp.float32)


def calstm_cell_pallas_padded(h_lower, c_lower, h_prev, c_prev, params):
    """One CALSTM step in padded kernel layout.

    h_lower/h_prev: (Bp, Hp) bf16; c_lower/c_prev: (Bp, Hp) f32 (Bp%16==0, Hp%128==0).
    Returns ((h bf16, c f32), (gfp, gfl, go) bf16), all (Bp, Hp) -- ready to feed the
    next timestep with no pad/slice/convert on the recurrent critical path.
    Padded rows/cols stay zero (padded weights/bias/coefs are zero).
    """
    Hp = params['Hp']
    Bp = h_lower.shape[0]
    TB = _tb_from_bp(Bp)
    ew_dtype = params['ew_dtype']

    def run(single_buffer_invariants):
        state_spec = pl.BlockSpec((TB, Hp), lambda i: (i, 0))

        def pinned(shape):
            idx = (lambda i: (0, 0))
            if single_buffer_invariants:
                # Grid-invariant operand: one VMEM copy is enough.
                return pl.BlockSpec(shape, idx, pipeline_mode=pl.Buffered(1))
            return pl.BlockSpec(shape, idx)

        w_spec = pinned((Hp, 5 * Hp))
        brow_spec = pinned((1, 5 * Hp))
        crow_spec = pinned((1, Hp))

        # Explicit VMEM budget: weights (+bias/coefs) x buffering, double-buffered
        # state tiles in/out, gates slab + slack; clamped to v7x's 64 MiB physical VMEM.
        wbuf = 1 if single_buffer_invariants else 2
        vmem_bytes = (wbuf * (2 * Hp * 5 * Hp * 2 + 5 * Hp * 4 + 2 * Hp * 4)
                      + 2 * (2 * TB * Hp * 2 + 2 * TB * Hp * 4)   # in: h bf16, c f32
                      + 2 * (TB * Hp * 4 + 4 * TB * Hp * 2)       # out: c f32, h+gates bf16
                      + 2 * TB * 5 * Hp * 4)                      # gates slab / slack
        vmem_limit = int(min(max(vmem_bytes + (4 << 20), 16 << 20), 64 << 20))

        flops = 2 * Bp * (2 * Hp) * (5 * Hp) + 10 * Bp * Hp
        transcendentals = 6 * Bp * Hp
        bytes_accessed = (2 * Hp * 5 * Hp * 2 + 5 * Hp * 4 + 2 * Hp * 4
                          + 2 * Bp * Hp * 2 + 2 * Bp * Hp * 4
                          + Bp * Hp * 4 + 4 * Bp * Hp * 2)

        out_shapes = (jax.ShapeDtypeStruct((Bp, Hp), jnp.bfloat16),   # h
                      jax.ShapeDtypeStruct((Bp, Hp), jnp.float32),    # c
                      jax.ShapeDtypeStruct((Bp, Hp), jnp.bfloat16),   # sig(f_prev+1)
                      jax.ShapeDtypeStruct((Bp, Hp), jnp.bfloat16),   # sig(f_lower+1)
                      jax.ShapeDtypeStruct((Bp, Hp), jnp.bfloat16))   # sig(o)

        return pl.pallas_call(
            functools.partial(_calstm_kernel, hpad=Hp, ew_dtype=ew_dtype),
            grid_spec=pltpu.PrefetchScalarGridSpec(
                num_scalar_prefetch=0,
                grid=(Bp // TB,),
                in_specs=[state_spec, state_spec, state_spec, state_spec,
                          w_spec, w_spec, brow_spec, crow_spec, crow_spec],
                out_specs=(state_spec,) * 5,
            ),
            out_shape=out_shapes,
            compiler_params=pltpu.CompilerParams(
                dimension_semantics=("parallel",),
                vmem_limit_bytes=vmem_limit),
            cost_estimate=pl.CostEstimate(
                flops=flops, transcendentals=transcendentals,
                bytes_accessed=bytes_accessed),
        )(h_lower, h_prev, c_lower, c_prev,
          params['w_low'], params['w_prev'], params['bias'],
          params['coef_prev'], params['coef_low'])

    try:
        outs = run(True)
    except Exception:
        # Fallback if this jax version rejects pipeline_mode=Buffered(1) on pallas_call.
        outs = run(False)

    h, c, gfp, gfl, go = outs
    return (h, c), (gfp, gfl, go)


# ---------------------------------------------------------------------------
# Convenience single-step wrapper (pads/unpads around the padded core)
# ---------------------------------------------------------------------------
def calstm_cell_pallas(h_lower, c_lower, h_prev, c_prev, params):
    """Pallas forward of CALSTMCell (h_lower_proj=None config).

    Returns ((h, c), (sig(f_prev+1), sig(f_lower+1), sig(o))), all (B, H) f32.
    For recurrent loops, prefer calstm_cell_pallas_padded with pad_calstm_state /
    unpad_calstm_out called once outside the time loop.
    """
    B = h_lower.shape[0]
    _, Bp = _pick_batch_tile(B)
    hl, cl = pad_calstm_state(h_lower, c_lower, params, Bp)
    hp, cp = pad_calstm_state(h_prev, c_prev, params, Bp)
    (h, c), (gfp, gfl, go) = calstm_cell_pallas_padded(hl, cl, hp, cp, params)
    h, c, gfp, gfl, go = (unpad_calstm_out(x, params, B) for x in (h, c, gfp, gfl, go))
    return (h, c), (gfp, gfl, go)


# ---------------------------------------------------------------------------
# Pure-JAX reference mirroring the PyTorch forward
# ---------------------------------------------------------------------------
def calstm_cell_ref(h_lower, c_lower, h_prev, c_prev,
                    weight, bias, fuse_type=False, forget_weight=None):
    H = h_lower.shape[1]
    x = jnp.concatenate([h_lower, h_prev], axis=1)
    gates = x @ weight.T + bias
    i, f_prev, f_lower, u, o = [gates[:, k * H:(k + 1) * H] for k in range(5)]
    w_prev, w_low = _fuse_weights(fuse_type, H, forget_weight)
    c = (w_prev * (c_prev * jax.nn.sigmoid(f_prev + 1.0))
         + w_low * (c_lower * jax.nn.sigmoid(f_lower + 1.0))
         + jnp.tanh(u) * jax.nn.sigmoid(i))
    h = jax.nn.sigmoid(o) * jnp.tanh(c)
    return (h, c), (jax.nn.sigmoid(f_prev + 1.0),
                    jax.nn.sigmoid(f_lower + 1.0),
                    jax.nn.sigmoid(o))


def orthogonal_init(key, shape):
    """Deterministic orthogonal init (mimics nn.init.orthogonal_)."""
    rows, cols = shape
    n = max(rows, cols)
    a = jax.random.normal(key, (n, n), jnp.float32)
    q, r = jnp.linalg.qr(a)
    q = q * jnp.sign(jnp.diag(r))[None, :]
    return q[:rows, :cols]


if __name__ == "__main__":
    B, H = 4, 32
    key = jax.random.PRNGKey(0)
    k1, k2, k3, k4, k5, k6 = jax.random.split(key, 6)

    # Parameters (shapes from __init__: Linear(2H -> 5H)).
    weight = orthogonal_init(k5, (5 * H, 2 * H))          # (5H, 2H)
    bias = jnp.zeros((5 * H,), jnp.float32)               # init.constant_(0)
    forget_weight = 0.01 * jax.random.normal(k6, (H,))    # only used for 'param'

    # Inputs: input=(h_lower, c_lower), hx=(h_prev, c_prev).
    h_lower = jax.random.normal(k1, (B, H), jnp.float32)
    c_lower = jax.random.normal(k2, (B, H), jnp.float32)
    h_prev = jax.random.normal(k3, (B, H), jnp.float32)
    c_prev = jax.random.normal(k4, (B, H), jnp.float32)

    # bf16 matmul / bf16 writeback -> compare against exact-f32 reference, relaxed tol.
    TOL = dict(rtol=3e-2, atol=3e-2)

    for fuse_type in ('avg', 'param'):
        params = prepare_calstm_params(weight, bias, H, fuse_type=fuse_type,
                                       forget_weight=forget_weight)
        (h, c), (gfp, gfl, go) = calstm_cell_pallas(
            h_lower, c_lower, h_prev, c_prev, params)
        jax.block_until_ready((h, c, gfp, gfl, go))

        (h_r, c_r), (gfp_r, gfl_r, go_r) = calstm_cell_ref(
            h_lower, c_lower, h_prev, c_prev, weight, bias,
            fuse_type=fuse_type, forget_weight=forget_weight)

        np.testing.assert_allclose(np.asarray(h), np.asarray(h_r), **TOL)
        np.testing.assert_allclose(np.asarray(c), np.asarray(c_r), **TOL)
        np.testing.assert_allclose(np.asarray(gfp), np.asarray(gfp_r), **TOL)
        np.testing.assert_allclose(np.asarray(gfl), np.asarray(gfl_r), **TOL)
        np.testing.assert_allclose(np.asarray(go), np.asarray(go_r), **TOL)

    # Short recurrent chain with state kept in padded bf16/f32 kernel layout across
    # steps (validates end-of-sequence error, not just one step).
    T = 3
    params = prepare_calstm_params(weight, bias, H, fuse_type='add')
    _, Bp = _pick_batch_tile(B)
    hl_seq = jax.random.normal(k1, (T, B, H), jnp.float32)
    cl_seq = jax.random.normal(k2, (T, B, H), jnp.float32)
    h_p, c_p = pad_calstm_state(jnp.zeros((B, H), jnp.float32),
                                jnp.zeros((B, H), jnp.float32), params, Bp)
    h_r = jnp.zeros((B, H), jnp.float32)
    c_r = jnp.zeros((B, H), jnp.float32)
    for t in range(T):
        hl_p, cl_p = pad_calstm_state(hl_seq[t], cl_seq[t], params, Bp)
        (h_p, c_p), _ = calstm_cell_pallas_padded(hl_p, cl_p, h_p, c_p, params)
        (h_r, c_r), _ = calstm_cell_ref(hl_seq[t], cl_seq[t], h_r, c_r,
                                        weight, bias, fuse_type='add')
    jax.block_until_ready((h_p, c_p))
    np.testing.assert_allclose(np.asarray(unpad_calstm_out(h_p, params, B)),
                               np.asarray(h_r), rtol=5e-2, atol=5e-2)
    np.testing.assert_allclose(np.asarray(unpad_calstm_out(c_p, params, B)),
                               np.asarray(c_r), rtol=5e-2, atol=5e-2)

    print("KERNEL_OK")
</pallas_src>

<mosaic_0001>
module attributes {stable_mosaic.version = 11 : i64} {
  func.func @_calstm_kernel(%arg0: i32, %arg1: memref<16x128xbf16, #tpu.memory_space<vmem>>, %arg2: memref<16x128xbf16, #tpu.memory_space<vmem>>, %arg3: memref<16x128xf32, #tpu.memory_space<vmem>>, %arg4: memref<16x128xf32, #tpu.memory_space<vmem>>, %arg5: memref<128x640xbf16, #tpu.memory_space<vmem>>, %arg6: memref<128x640xbf16, #tpu.memory_space<vmem>>, %arg7: memref<1x640xf32, #tpu.memory_space<vmem>>, %arg8: memref<1x128xf32, #tpu.memory_space<vmem>>, %arg9: memref<1x128xf32, #tpu.memory_space<vmem>>, %arg10: memref<16x128xbf16, #tpu.memory_space<vmem>>, %arg11: memref<16x128xf32, #tpu.memory_space<vmem>>, %arg12: memref<16x128xbf16, #tpu.memory_space<vmem>>, %arg13: memref<16x128xbf16, #tpu.memory_space<vmem>>, %arg14: memref<16x128xbf16, #tpu.memory_space<vmem>>) attributes {dimension_semantics = [#tpu.dimension_semantics<parallel>], iteration_bounds = array<i64: 1>, scalar_prefetch = 0 : i64, scratch_operands = 0 : i64, tpu.core_type = #tpu.core_type<tc>, window_params = [{transform_indices = @transform_0, window_bounds = array<i64: 16, 128>}, {transform_indices = @transform_1, window_bounds = array<i64: 16, 128>}, {transform_indices = @transform_2, window_bounds = array<i64: 16, 128>}, {transform_indices = @transform_3, window_bounds = array<i64: 16, 128>}, {pipeline_mode = #tpu.pipeline_mode<synchronous>, transform_indices = @transform_4, window_bounds = array<i64: 128, 640>}, {pipeline_mode = #tpu.pipeline_mode<synchronous>, transform_indices = @transform_5, window_bounds = array<i64: 128, 640>}, {pipeline_mode = #tpu.pipeline_mode<synchronous>, transform_indices = @transform_6, window_bounds = array<i64: 1, 640>}, {pipeline_mode = #tpu.pipeline_mode<synchronous>, transform_indices = @transform_7, window_bounds = array<i64: 1, 128>}, {pipeline_mode = #tpu.pipeline_mode<synchronous>, transform_indices = @transform_8, window_bounds = array<i64: 1, 128>}, {transform_indices = @transform_9, window_bounds = array<i64: 16, 128>}, {transform_indices = @transform_10, window_bounds = array<i64: 16, 128>}, {transform_indices = @transform_11, window_bounds = array<i64: 16, 128>}, {transform_indices = @transform_12, window_bounds = array<i64: 16, 128>}, {transform_indices = @transform_13, window_bounds = array<i64: 16, 128>}]} {
    %c0 = arith.constant 0 : index
    %c0_0 = arith.constant 0 : index
    %0 = vector.load %arg1[%c0, %c0_0] : memref<16x128xbf16, #tpu.memory_space<vmem>>, vector<16x128xbf16>
    %c0_1 = arith.constant 0 : index
    %c0_2 = arith.constant 0 : index
    %1 = vector.load %arg5[%c0_1, %c0_2] : memref<128x640xbf16, #tpu.memory_space<vmem>>, vector<128x640xbf16>
    %cst = arith.constant dense<0.000000e+00> : vector<16x640xf32>
    %2 = tpu.matmul %0, %1, %cst {dimension_numbers = #tpu.dot_dimension_numbers<[1], [0], [0], [1], [0, 0, 1, 1], [], []>} : vector<16x128xbf16>, vector<128x640xbf16>, vector<16x640xf32> -> vector<16x640xf32>
    %c0_3 = arith.constant 0 : index
    %c0_4 = arith.constant 0 : index
    %3 = vector.load %arg2[%c0_3, %c0_4] : memref<16x128xbf16, #tpu.memory_space<vmem>>, vector<16x128xbf16>
    %c0_5 = arith.constant 0 : index
    %c0_6 = arith.constant 0 : index
    %4 = vector.load %arg6[%c0_5, %c0_6] : memref<128x640xbf16, #tpu.memory_space<vmem>>, vector<128x640xbf16>
    %cst_7 = arith.constant dense<0.000000e+00> : vector<16x640xf32>
    %5 = tpu.matmul %3, %4, %cst_7 {dimension_numbers = #tpu.dot_dimension_numbers<[1], [0], [0], [1], [0, 0, 1, 1], [], []>} : vector<16x128xbf16>, vector<128x640xbf16>, vector<16x640xf32> -> vector<16x640xf32>
    %6 = arith.addf %2, %5 : vector<16x640xf32>
    %c0_8 = arith.constant 0 : index
    %c0_9 = arith.constant 0 : index
    %7 = vector.load %arg7[%c0_8, %c0_9] : memref<1x640xf32, #tpu.memory_space<vmem>>, vector<1x640xf32>
    %8 = vector.broadcast %7 : vector<1x640xf32> to vector<16x640xf32>
    %9 = arith.addf %6, %8 : vector<16x640xf32>
    %10 = arith.truncf %9 : vector<16x640xf32> to vector<16x640xbf16>
    %11 = vector.extract_strided_slice %10 {offsets = [0, 0], sizes = [16, 128], strides = [1, 1]} : vector<16x640xbf16> to vector<16x128xbf16>
    %12 = vector.extract_strided_slice %10 {offsets = [0, 128], sizes = [16, 128], strides = [1, 1]} : vector<16x640xbf16> to vector<16x128xbf16>
    %13 = vector.extract_strided_slice %10 {offsets = [0, 256], sizes = [16, 128], strides = [1, 1]} : vector<16x640xbf16> to vector<16x128xbf16>
    %14 = vector.extract_strided_slice %10 {offsets = [0, 384], sizes = [16, 128], strides = [1, 1]} : vector<16x640xbf16> to vector<16x128xbf16>
    %15 = vector.extract_strided_slice %10 {offsets = [0, 512], sizes = [16, 128], strides = [1, 1]} : vector<16x640xbf16> to vector<16x128xbf16>
    %16 = arith.negf %12 : vector<16x128xbf16>
    %17 = math.exp %16 : vector<16x128xbf16>
    %cst_10 = arith.constant 1.000000e+00 : bf16
    %18 = vector.broadcast %cst_10 : bf16 to vector<16x128xbf16>
    %19 = arith.addf %18, %17 : vector<16x128xbf16>
    %20 = arith.divf %18, %19 : vector<16x128xbf16>
    %21 = arith.negf %13 : vector<16x128xbf16>
    %22 = math.exp %21 : vector<16x128xbf16>
    %cst_11 = arith.constant 1.000000e+00 : bf16
    %23 = vector.broadcast %cst_11 : bf16 to vector<16x128xbf16>
    %24 = arith.addf %23, %22 : vector<16x128xbf16>
    %25 = arith.divf %23, %24 : vector<16x128xbf16>
    %26 = arith.negf %15 : vector<16x128xbf16>
    %27 = math.exp %26 : vector<16x128xbf16>
    %cst_12 = arith.constant 1.000000e+00 : bf16
    %28 = vector.broadcast %cst_12 : bf16 to vector<16x128xbf16>
    %29 = arith.addf %28, %27 : vector<16x128xbf16>
    %30 = arith.divf %28, %29 : vector<16x128xbf16>
    %31 = arith.negf %11 : vector<16x128xbf16>
    %32 = math.exp %31 : vector<16x128xbf16>
    %cst_13 = arith.constant 1.000000e+00 : bf16
    %33 = vector.broadcast %cst_13 : bf16 to vector<16x128xbf16>
    %34 = arith.addf %33, %32 : vector<16x128xbf16>
    %35 = arith.divf %33, %34 : vector<16x128xbf16>
    %36 = math.tanh %14 : vector<16x128xbf16>
    %c0_14 = arith.constant 0 : index
    %c0_15 = arith.constant 0 : index
    %37 = vector.load %arg8[%c0_14, %c0_15] : memref<1x128xf32, #tpu.memory_space<vmem>>, vector<1x128xf32>
    %c0_16 = arith.constant 0 : index
    %c0_17 = arith.constant 0 : index
    %38 = vector.load %arg4[%c0_16, %c0_17] : memref<16x128xf32, #tpu.memory_space<vmem>>, vector<16x128xf32>
    %39 = arith.extf %20 : vector<16x128xbf16> to vector<16x128xf32>
    %40 = arith.mulf %38, %39 : vector<16x128xf32>
    %41 = vector.broadcast %37 : vector<1x128xf32> to vector<16x128xf32>
    %42 = arith.mulf %41, %40 : vector<16x128xf32>
    %c0_18 = arith.constant 0 : index
    %c0_19 = arith.constant 0 : index
    %43 = vector.load %arg9[%c0_18, %c0_19] : memref<1x128xf32, #tpu.memory_space<vmem>>, vector<1x128xf32>
    %c0_20 = arith.constant 0 : index
    %c0_21 = arith.constant 0 : index
    %44 = vector.load %arg3[%c0_20, %c0_21] : memref<16x128xf32, #tpu.memory_space<vmem>>, vector<16x128xf32>
    %45 = arith.extf %25 : vector<16x128xbf16> to vector<16x128xf32>
    %46 = arith.mulf %44, %45 : vector<16x128xf32>
    %47 = vector.broadcast %43 : vector<1x128xf32> to vector<16x128xf32>
    %48 = arith.mulf %47, %46 : vector<16x128xf32>
    %49 = arith.addf %42, %48 : vector<16x128xf32>
    %50 = arith.extf %36 : vector<16x128xbf16> to vector<16x128xf32>
    %51 = arith.extf %35 : vector<16x128xbf16> to vector<16x128xf32>
    %52 = arith.mulf %50, %51 : vector<16x128xf32>
    %53 = arith.addf %49, %52 : vector<16x128xf32>
    %54 = arith.truncf %53 : vector<16x128xf32> to vector<16x128xbf16>
    %55 = math.tanh %54 : vector<16x128xbf16>
    %56 = arith.mulf %30, %55 : vector<16x128xbf16>
    %c0_22 = arith.constant 0 : index
    %c0_23 = arith.constant 0 : index
    %57 = vector.load %arg10[%c0_22, %c0_23] : memref<16x128xbf16, #tpu.memory_space<vmem>>, vector<16x128xbf16>
    tpu.vector_store %arg10[%c0_22, %c0_23], %56 {strides = array<i32>} : memref<16x128xbf16, #tpu.memory_space<vmem>>, vector<16x128xbf16>,
    %c0_24 = arith.constant 0 : index
    %c0_25 = arith.constant 0 : index
    %58 = vector.load %arg11[%c0_24, %c0_25] : memref<16x128xf32, #tpu.memory_space<vmem>>, vector<16x128xf32>
    tpu.vector_store %arg11[%c0_24, %c0_25], %53 {strides = array<i32>} : memref<16x128xf32, #tpu.memory_space<vmem>>, vector<16x128xf32>,
    %c0_26 = arith.constant 0 : index
    %c0_27 = arith.constant 0 : index
    %59 = vector.load %arg12[%c0_26, %c0_27] : memref<16x128xbf16, #tpu.memory_space<vmem>>, vector<16x128xbf16>
    tpu.vector_store %arg12[%c0_26, %c0_27], %20 {strides = array<i32>} : memref<16x128xbf16, #tpu.memory_space<vmem>>, vector<16x128xbf16>,
    %c0_28 = arith.constant 0 : index
    %c0_29 = arith.constant 0 : index
    %60 = vector.load %arg13[%c0_28, %c0_29] : memref<16x128xbf16, #tpu.memory_space<vmem>>, vector<16x128xbf16>
    tpu.vector_store %arg13[%c0_28, %c0_29], %25 {strides = array<i32>} : memref<16x128xbf16, #tpu.memory_space<vmem>>, vector<16x128xbf16>,
    %c0_30 = arith.constant 0 : index
    %c0_31 = arith.constant 0 : index
    %61 = vector.load %arg14[%c0_30, %c0_31] : memref<16x128xbf16, #tpu.memory_space<vmem>>, vector<16x128xbf16>
    tpu.vector_store %arg14[%c0_30, %c0_31], %30 {strides = array<i32>} : memref<16x128xbf16, #tpu.memory_space<vmem>>, vector<16x128xbf16>,
    return
  }
  func.func @transform_0(%arg0: i32) -> (i32, i32) {
    %c0_i32 = arith.constant 0 : i32
    %c0_i32_0 = arith.constant 0 : i32
    return %arg0, %c0_i32 : i32, i32
  }
  func.func @transform_1(%arg0: i32) -> (i32, i32) {
    %c0_i32 = arith.constant 0 : i32
    %c0_i32_0 = arith.constant 0 : i32
    return %arg0, %c0_i32 : i32, i32
  }
  func.func @transform_2(%arg0: i32) -> (i32, i32) {
    %c0_i32 = arith.constant 0 : i32
    %c0_i32_0 = arith.constant 0 : i32
    return %arg0, %c0_i32 : i32, i32
  }
  func.func @transform_3(%arg0: i32) -> (i32, i32) {
    %c0_i32 = arith.constant 0 : i32
    %c0_i32_0 = arith.constant 0 : i32
    return %arg0, %c0_i32 : i32, i32
  }
  func.func @transform_4(%arg0: i32) -> (i32, i32) {
    %c0_i32 = arith.constant 0 : i32
    %c0_i32_0 = arith.constant 0 : i32
    %c0_i32_1 = arith.constant 0 : i32
    return %c0_i32, %c0_i32_0 : i32, i32
  }
  func.func @transform_5(%arg0: i32) -> (i32, i32) {
    %c0_i32 = arith.constant 0 : i32
    %c0_i32_0 = arith.constant 0 : i32
    %c0_i32_1 = arith.constant 0 : i32
    return %c0_i32, %c0_i32_0 : i32, i32
  }
  func.func @transform_6(%arg0: i32) -> (i32, i32) {
    %c0_i32 = arith.constant 0 : i32
    %c0_i32_0 = arith.constant 0 : i32
    %c0_i32_1 = arith.constant 0 : i32
    return %c0_i32, %c0_i32_0 : i32, i32
  }
  func.func @transform_7(%arg0: i32) -> (i32, i32) {
    %c0_i32 = arith.constant 0 : i32
    %c0_i32_0 = arith.constant 0 : i32
    %c0_i32_1 = arith.constant 0 : i32
    return %c0_i32, %c0_i32_0 : i32, i32
  }
  func.func @transform_8(%arg0: i32) -> (i32, i32) {
    %c0_i32 = arith.constant 0 : i32
    %c0_i32_0 = arith.constant 0 : i32
    %c0_i32_1 = arith.constant 0 : i32
    return %c0_i32, %c0_i32_0 : i32, i32
  }
  func.func @transform_9(%arg0: i32) -> (i32, i32) {
    %c0_i32 = arith.constant 0 : i32
    %c0_i32_0 = arith.constant 0 : i32
    return %arg0, %c0_i32 : i32, i32
  }
  func.func @transform_10(%arg0: i32) -> (i32, i32) {
    %c0_i32 = arith.constant 0 : i32
    %c0_i32_0 = arith.constant 0 : i32
    return %arg0, %c0_i32 : i32, i32
  }
  func.func @transform_11(%arg0: i32) -> (i32, i32) {
    %c0_i32 = arith.constant 0 : i32
    %c0_i32_0 = arith.constant 0 : i32
    return %arg0, %c0_i32 : i32, i32
  }
  func.func @transform_12(%arg0: i32) -> (i32, i32) {
    %c0_i32 = arith.constant 0 : i32
    %c0_i32_0 = arith.constant 0 : i32
    return %arg0, %c0_i32 : i32, i32
  }
  func.func @transform_13(%arg0: i32) -> (i32, i32) {
    %c0_i32 = arith.constant 0 : i32
    %c0_i32_0 = arith.constant 0 : i32
    return %arg0, %c0_i32 : i32, i32
  }
}

module attributes {stable_mosaic.version = 11 : i64} {
  func.func @_calstm_kernel(%arg0: i32, %arg1: memref<16x128xbf16, #tpu.memory_space<vmem>>, %arg2: memref<16x128xbf16, #tpu.memory_space<vmem>>, %arg3: memref<16x128xf32, #tpu.memory_space<vmem>>, %arg4: memref<16x128xf32, #tpu.memory_space<vmem>>, %arg5: memref<128x640xbf16, #tpu.memory_space<vmem>>, %arg6: memref<128x640xbf16, #tpu.memory_space<vmem>>, %arg7: memref<1x640xf32, #tpu.memory_space<vmem>>, %arg8: memref<1x128xf32, #tpu.memory_space<vmem>>, %arg9: memref<1x128xf32, #tpu.memory_space<vmem>>, %arg10: memref<16x128xbf16, #tpu.memory_space<vmem>>, %arg11: memref<16x128xf32, #tpu.memory_space<vmem>>, %arg12: memref<16x128xbf16, #tpu.memory_space<vmem>>, %arg13: memref<16x128xbf16, #tpu.memory_space<vmem>>, %arg14: memref<16x128xbf16, #tpu.memory_space<vmem>>) attributes {dimension_semantics = [#tpu.dimension_semantics<parallel>], iteration_bounds = array<i64: 1>, scalar_prefetch = 0 : i64, scratch_operands = 0 : i64, tpu.core_type = #tpu.core_type<tc>, window_params = [{transform_indices = @transform_0, window_bounds = array<i64: 16, 128>}, {transform_indices = @transform_1, window_bounds = array<i64: 16, 128>}, {transform_indices = @transform_2, window_bounds = array<i64: 16, 128>}, {transform_indices = @transform_3, window_bounds = array<i64: 16, 128>}, {pipeline_mode = #tpu.pipeline_mode<synchronous>, transform_indices = @transform_4, window_bounds = array<i64: 128, 640>}, {pipeline_mode = #tpu.pipeline_mode<synchronous>, transform_indices = @transform_5, window_bounds = array<i64: 128, 640>}, {pipeline_mode = #tpu.pipeline_mode<synchronous>, transform_indices = @transform_6, window_bounds = array<i64: 1, 640>}, {pipeline_mode = #tpu.pipeline_mode<synchronous>, transform_indices = @transform_7, window_bounds = array<i64: 1, 128>}, {pipeline_mode = #tpu.pipeline_mode<synchronous>, transform_indices = @transform_8, window_bounds = array<i64: 1, 128>}, {transform_indices = @transform_9, window_bounds = array<i64: 16, 128>}, {transform_indices = @transform_10, window_bounds = array<i64: 16, 128>}, {transform_indices = @transform_11, window_bounds = array<i64: 16, 128>}, {transform_indices = @transform_12, window_bounds = array<i64: 16, 128>}, {transform_indices = @transform_13, window_bounds = array<i64: 16, 128>}]} {
    %c0 = arith.constant 0 : index
    %c0_0 = arith.constant 0 : index
    %0 = vector.load %arg1[%c0, %c0_0] : memref<16x128xbf16, #tpu.memory_space<vmem>>, vector<16x128xbf16>
    %c0_1 = arith.constant 0 : index
    %c0_2 = arith.constant 0 : index
    %1 = vector.load %arg5[%c0_1, %c0_2] : memref<128x640xbf16, #tpu.memory_space<vmem>>, vector<128x640xbf16>
    %cst = arith.constant dense<0.000000e+00> : vector<16x640xf32>
    %2 = tpu.matmul %0, %1, %cst {dimension_numbers = #tpu.dot_dimension_numbers<[1], [0], [0], [1], [0, 0, 1, 1], [], []>} : vector<16x128xbf16>, vector<128x640xbf16>, vector<16x640xf32> -> vector<16x640xf32>
    %c0_3 = arith.constant 0 : index
    %c0_4 = arith.constant 0 : index
    %3 = vector.load %arg2[%c0_3, %c0_4] : memref<16x128xbf16, #tpu.memory_space<vmem>>, vector<16x128xbf16>
    %c0_5 = arith.constant 0 : index
    %c0_6 = arith.constant 0 : index
    %4 = vector.load %arg6[%c0_5, %c0_6] : memref<128x640xbf16, #tpu.memory_space<vmem>>, vector<128x640xbf16>
    %cst_7 = arith.constant dense<0.000000e+00> : vector<16x640xf32>
    %5 = tpu.matmul %3, %4, %cst_7 {dimension_numbers = #tpu.dot_dimension_numbers<[1], [0], [0], [1], [0, 0, 1, 1], [], []>} : vector<16x128xbf16>, vector<128x640xbf16>, vector<16x640xf32> -> vector<16x640xf32>
    %6 = arith.addf %2, %5 : vector<16x640xf32>
    %c0_8 = arith.constant 0 : index
    %c0_9 = arith.constant 0 : index
    %7 = vector.load %arg7[%c0_8, %c0_9] : memref<1x640xf32, #tpu.memory_space<vmem>>, vector<1x640xf32>
    %8 = vector.broadcast %7 : vector<1x640xf32> to vector<16x640xf32>
    %9 = arith.addf %6, %8 : vector<16x640xf32>
    %10 = arith.truncf %9 : vector<16x640xf32> to vector<16x640xbf16>
    %11 = vector.extract_strided_slice %10 {offsets = [0, 0], sizes = [16, 128], strides = [1, 1]} : vector<16x640xbf16> to vector<16x128xbf16>
    %12 = vector.extract_strided_slice %10 {offsets = [0, 128], sizes = [16, 128], strides = [1, 1]} : vector<16x640xbf16> to vector<16x128xbf16>
    %13 = vector.extract_strided_slice %10 {offsets = [0, 256], sizes = [16, 128], strides = [1, 1]} : vector<16x640xbf16> to vector<16x128xbf16>
    %14 = vector.extract_strided_slice %10 {offsets = [0, 384], sizes = [16, 128], strides = [1, 1]} : vector<16x640xbf16> to vector<16x128xbf16>
    %15 = vector.extract_strided_slice %10 {offsets = [0, 512], sizes = [16, 128], strides = [1, 1]} : vector<16x640xbf16> to vector<16x128xbf16>
    %16 = arith.negf %12 : vector<16x128xbf16>
    %17 = math.exp %16 : vector<16x128xbf16>
    %cst_10 = arith.constant 1.000000e+00 : bf16
    %18 = vector.broadcast %cst_10 : bf16 to vector<16x128xbf16>
    %19 = arith.addf %18, %17 : vector<16x128xbf16>
    %20 = arith.divf %18, %19 : vector<16x128xbf16>
    %21 = arith.negf %13 : vector<16x128xbf16>
    %22 = math.exp %21 : vector<16x128xbf16>
    %cst_11 = arith.constant 1.000000e+00 : bf16
    %23 = vector.broadcast %cst_11 : bf16 to vector<16x128xbf16>
    %24 = arith.addf %23, %22 : vector<16x128xbf16>
    %25 = arith.divf %23, %24 : vector<16x128xbf16>
    %26 = arith.negf %15 : vector<16x128xbf16>
    %27 = math.exp %26 : vector<16x128xbf16>
    %cst_12 = arith.constant 1.000000e+00 : bf16
    %28 = vector.broadcast %cst_12 : bf16 to vector<16x128xbf16>
    %29 = arith.addf %28, %27 : vector<16x128xbf16>
    %30 = arith.divf %28, %29 : vector<16x128xbf16>
    %31 = arith.negf %11 : vector<16x128xbf16>
    %32 = math.exp %31 : vector<16x128xbf16>
    %cst_13 = arith.constant 1.000000e+00 : bf16
    %33 = vector.broadcast %cst_13 : bf16 to vector<16x128xbf16>
    %34 = arith.addf %33, %32 : vector<16x128xbf16>
    %35 = arith.divf %33, %34 : vector<16x128xbf16>
    %36 = math.tanh %14 : vector<16x128xbf16>
    %c0_14 = arith.constant 0 : index
    %c0_15 = arith.constant 0 : index
    %37 = vector.load %arg8[%c0_14, %c0_15] : memref<1x128xf32, #tpu.memory_space<vmem>>, vector<1x128xf32>
    %c0_16 = arith.constant 0 : index
    %c0_17 = arith.constant 0 : index
    %38 = vector.load %arg4[%c0_16, %c0_17] : memref<16x128xf32, #tpu.memory_space<vmem>>, vector<16x128xf32>
    %39 = arith.extf %20 : vector<16x128xbf16> to vector<16x128xf32>
    %40 = arith.mulf %38, %39 : vector<16x128xf32>
    %41 = vector.broadcast %37 : vector<1x128xf32> to vector<16x128xf32>
    %42 = arith.mulf %41, %40 : vector<16x128xf32>
    %c0_18 = arith.constant 0 : index
    %c0_19 = arith.constant 0 : index
    %43 = vector.load %arg9[%c0_18, %c0_19] : memref<1x128xf32, #tpu.memory_space<vmem>>, vector<1x128xf32>
    %c0_20 = arith.constant 0 : index
    %c0_21 = arith.constant 0 : index
    %44 = vector.load %arg3[%c0_20, %c0_21] : memref<16x128xf32, #tpu.memory_space<vmem>>, vector<16x128xf32>
    %45 = arith.extf %25 : vector<16x128xbf16> to vector<16x128xf32>
    %46 = arith.mulf %44, %45 : vector<16x128xf32>
    %47 = vector.broadcast %43 : vector<1x128xf32> to vector<16x128xf32>
    %48 = arith.mulf %47, %46 : vector<16x128xf32>
    %49 = arith.addf %42, %48 : vector<16x128xf32>
    %50 = arith.extf %36 : vector<16x128xbf16> to vector<16x128xf32>
    %51 = arith.extf %35 : vector<16x128xbf16> to vector<16x128xf32>
    %52 = arith.mulf %50, %51 : vector<16x128xf32>
    %53 = arith.addf %49, %52 : vector<16x128xf32>
    %54 = arith.truncf %53 : vector<16x128xf32> to vector<16x128xbf16>
    %55 = math.tanh %54 : vector<16x128xbf16>
    %56 = arith.mulf %30, %55 : vector<16x128xbf16>
    %c0_22 = arith.constant 0 : index
    %c0_23 = arith.constant 0 : index
    %57 = vector.load %arg10[%c0_22, %c0_23] : memref<16x128xbf16, #tpu.memory_space<vmem>>, vector<16x128xbf16>
    tpu.vector_store %arg10[%c0_22, %c0_23], %56 {strides = array<i32>} : memref<16x128xbf16, #tpu.memory_space<vmem>>, vector<16x128xbf16>,
    %c0_24 = arith.constant 0 : index
    %c0_25 = arith.constant 0 : index
    %58 = vector.load %arg11[%c0_24, %c0_25] : memref<16x128xf32, #tpu.memory_space<vmem>>, vector<16x128xf32>
    tpu.vector_store %arg11[%c0_24, %c0_25], %53 {strides = array<i32>} : memref<16x128xf32, #tpu.memory_space<vmem>>, vector<16x128xf32>,
    %c0_26 = arith.constant 0 : index
    %c0_27 = arith.constant 0 : index
    %59 = vector.load %arg12[%c0_26, %c0_27] : memref<16x128xbf16, #tpu.memory_space<vmem>>, vector<16x128xbf16>
    tpu.vector_store %arg12[%c0_26, %c0_27], %20 {strides = array<i32>} : memref<16x128xbf16, #tpu.memory_space<vmem>>, vector<16x128xbf16>,
    %c0_28 = arith.constant 0 : index
    %c0_29 = arith.constant 0 : index
    %60 = vector.load %arg13[%c0_28, %c0_29] : memref<16x128xbf16, #tpu.memory_space<vmem>>, vector<16x128xbf16>
    tpu.vector_store %arg13[%c0_28, %c0_29], %25 {strides = array<i32>} : memref<16x128xbf16, #tpu.memory_space<vmem>>, vector<16x128xbf16>,
    %c0_30 = arith.constant 0 : index
    %c0_31 = arith.constant 0 : index
    %61 = vector.load %arg14[%c0_30, %c0_31] : memref<16x128xbf16, #tpu.memory_space<vmem>>, vector<16x128xbf16>
    tpu.vector_store %arg14[%c0_30, %c0_31], %30 {strides = array<i32>} : memref<16x128xbf16, #tpu.memory_space<vmem>>, vector<16x128xbf16>,
    return
  }
  func.func @transform_0(%arg0: i32) -> (i32, i32) {
    %c0_i32 = arith.constant 0 : i32
    %c0_i32_0 = arith.constant 0 : i32
    return %arg0, %c0_i32 : i32, i32
  }
  func.func @transform_1(%arg0: i32) -> (i32, i32) {
    %c0_i32 = arith.constant 0 : i32
    %c0_i32_0 = arith.constant 0 : i32
    return %arg0, %c0_i32 : i32, i32
  }
  func.func @transform_2(%arg0: i32) -> (i32, i32) {
    %c0_i32 = arith.constant 0 : i32
    %c0_i32_0 = arith.constant 0 : i32
    return %arg0, %c0_i32 : i32, i32
  }
  func.func @transform_3(%arg0: i32) -> (i32, i32) {
    %c0_i32 = arith.constant 0 : i32
    %c0_i32_0 = arith.constant 0 : i32
    return %arg0, %c0_i32 : i32, i32
  }
  func.func @transform_4(%arg0: i32) -> (i32, i32) {
    %c0_i32 = arith.constant 0 : i32
    %c0_i32_0 = arith.constant 0 : i32
    %c0_i32_1 = arith.constant 0 : i32
    return %c0_i32, %c0_i32_0 : i32, i32
  }
  func.func @transform_5(%arg0: i32) -> (i32, i32) {
    %c0_i32 = arith.constant 0 : i32
    %c0_i32_0 = arith.constant 0 : i32
    %c0_i32_1 = arith.constant 0 : i32
    return %c0_i32, %c0_i32_0 : i32, i32
  }
  func.func @transform_6(%arg0: i32) -> (i32, i32) {
    %c0_i32 = arith.constant 0 : i32
    %c0_i32_0 = arith.constant 0 : i32
    %c0_i32_1 = arith.constant 0 : i32
    return %c0_i32, %c0_i32_0 : i32, i32
  }
  func.func @transform_7(%arg0: i32) -> (i32, i32) {
    %c0_i32 = arith.constant 0 : i32
    %c0_i32_0 = arith.constant 0 : i32
    %c0_i32_1 = arith.constant 0 : i32
    return %c0_i32, %c0_i32_0 : i32, i32
  }
  func.func @transform_8(%arg0: i32) -> (i32, i32) {
    %c0_i32 = arith.constant 0 : i32
    %c0_i32_0 = arith.constant 0 : i32
    %c0_i32_1 = arith.constant 0 : i32
    return %c0_i32, %c0_i32_0 : i32, i32
  }
  func.func @transform_9(%arg0: i32) -> (i32, i32) {
    %c0_i32 = arith.constant 0 : i32
    %c0_i32_0 = arith.constant 0 : i32
    return %arg0, %c0_i32 : i32, i32
  }
  func.func @transform_10(%arg0: i32) -> (i32, i32) {
    %c0_i32 = arith.constant 0 : i32
    %c0_i32_0 = arith.constant 0 : i32
    return %arg0, %c0_i32 : i32, i32
  }
  func.func @transform_11(%arg0: i32) -> (i32, i32) {
    %c0_i32 = arith.constant 0 : i32
    %c0_i32_0 = arith.constant 0 : i32
    return %arg0, %c0_i32 : i32, i32
  }
  func.func @transform_12(%arg0: i32) -> (i32, i32) {
    %c0_i32 = arith.constant 0 : i32
    %c0_i32_0 = arith.constant 0 : i32
    return %arg0, %c0_i32 : i32, i32
  }
  func.func @transform_13(%arg0: i32) -> (i32, i32) {
    %c0_i32 = arith.constant 0 : i32
    %c0_i32_0 = arith.constant 0 : i32
    return %arg0, %c0_i32 : i32, i32
  }
}

</mosaic_0001>

<llo_original>
// kernel: tpu_custom_call.1
$region0: #{tpu_custom_call.1}
  #allocation0 [shape = 'u32[]', space=smem, size = 0x4, offset = 0x4, fixed_abs, tag = 'smem constant byte address 0x4 - core index']
  #allocation1 [shape = 'u32[72,128]{1,0:T(1,128)}', space=vmem, size = 0x9000, scoped, tag = 'internal scratch']
  %s0 = inlined_call_operand.hbm [shape: bf16[16,128], index: 0, kind: input, shape index: {}]
  %s1 = inlined_call_operand.hbm [shape: bf16[16,128], index: 1, kind: input, shape index: {}]
  %s2 = inlined_call_operand.hbm [shape: f32[16,128], index: 2, kind: input, shape index: {}]
  %s3 = inlined_call_operand.hbm [shape: f32[16,128], index: 3, kind: input, shape index: {}]
  %s4 = inlined_call_operand.hbm [shape: bf16[128,640], index: 4, kind: input, shape index: {}]
  %s5 = inlined_call_operand.hbm [shape: bf16[128,640], index: 5, kind: input, shape index: {}]
  %s6 = inlined_call_operand.vmem [shape: f32[1,640], index: 6, kind: input, shape index: {}]
  %s7 = inlined_call_operand.vmem [shape: f32[1,128], index: 7, kind: input, shape index: {}]
  %s8 = inlined_call_operand.vmem [shape: f32[1,128], index: 8, kind: input, shape index: {}]
  %s9 = inlined_call_operand.hbm [shape: bf16[16,128], index: 9, kind: output, shape index: {0}]
  %s10 = inlined_call_operand.hbm [shape: f32[16,128], index: 10, kind: output, shape index: {1}]
  %s11 = inlined_call_operand.hbm [shape: bf16[16,128], index: 11, kind: output, shape index: {2}]
  %s12 = inlined_call_operand.hbm [shape: bf16[16,128], index: 12, kind: output, shape index: {3}]
  %s13 = inlined_call_operand.hbm [shape: bf16[16,128], index: 13, kind: output, shape index: {4}]
  %14 = xla_tuple %s9, %s10, %s11, %s12, %s13
  %s15 = sld [smem:[#allocation0]]
  $region102: #{tpu_custom_call.1} parent=0
    _
  %s17 = ssub.s32 1, %s15
  %s18 = scalar_select 0, %s17, %s15
  $region1: #{tpu_custom_call.1} parent=0
    #allocation2 [shape = 'u8[4096]{0}', space=vmem, size = 0x1000, scoped, tag = 'input window, operand 0, single buffered']
    #allocation3 [shape = 's32[1]{0}', space=sflag, size = 0x4, scoped, tag = 'scoped memory for tpu_custom_call.1']
    #allocation4 [shape = 's32[1]{0}', space=sflag, size = 0x4, scoped, tag = 'scoped memory for tpu_custom_call.1']
    #allocation5 [shape = 'u8[4096]{0}', space=vmem, size = 0x1000, scoped, tag = 'input window, operand 1, single buffered']
    #allocation6 [shape = 's32[1]{0}', space=sflag, size = 0x4, scoped, tag = 'scoped memory for tpu_custom_call.1']
    #allocation7 [shape = 'u8[8192]{0}', space=vmem, size = 0x2000, scoped, tag = 'input window, operand 2, single buffered']
    #allocation8 [shape = 'u8[8192]{0}', space=vmem, size = 0x2000, scoped, tag = 'input window, operand 3, single buffered']
    #allocation9 [shape = 's32[1]{0}', space=sflag, size = 0x4, scoped, tag = 'scoped memory for tpu_custom_call.1']
    #allocation10 [shape = 'u8[163840]{0}', space=vmem, size = 0x28000, scoped, tag = 'input window, operand 4, single buffered']
    #allocation11 [shape = 'u8[163840]{0}', space=vmem, size = 0x28000, scoped, tag = 'input window, operand 5, single buffered']
    #allocation12 [shape = 's32[1]{0}', space=sflag, size = 0x4, scoped, tag = 'scoped memory for tpu_custom_call.1']
    #allocation13 [shape = 'u8[4096]{0}', space=vmem, size = 0x1000, scoped, tag = 'output window, operand 0, single buffered']
    #allocation14 [shape = 'u8[8192]{0}', space=vmem, size = 0x2000, scoped, tag = 'output window, operand 1, single buffered']
    #allocation15 [shape = 's32[1]{0}', space=sflag, size = 0x4, scoped, tag = 'scoped memory for tpu_custom_call.1']
    #allocation16 [shape = 'u8[4096]{0}', space=vmem, size = 0x1000, scoped, tag = 'output window, operand 2, single buffered']
    #allocation17 [shape = 'u8[4096]{0}', space=vmem, size = 0x1000, scoped, tag = 'output window, operand 3, single buffered']
    #allocation18 [shape = 's32[1]{0}', space=sflag, size = 0x4, scoped, tag = 'scoped memory for tpu_custom_call.1']
    #allocation19 [shape = 'u8[4096]{0}', space=vmem, size = 0x1000, scoped, tag = 'output window, operand 4, single buffered']
    %19 = vsyncpa [#allocation3], 0
    %20 = vsyncpa [#allocation6], 0
    %21 = vsyncpa [#allocation9], 0
    %22 = vsyncpa [#allocation12], 0
    %23 = vsyncpa [#allocation4], 0
    %24 = vsyncpa [#allocation15], 0
    %25 = vsyncpa [#allocation18], 0
    // Predicated region
    $region2: #{tpu_custom_call.1} parent=1 // pred_check
      _
    $region3: #{tpu_custom_call.1} parent=1 // pred_check_branch
      %27 = sbr.rel (0) target = $region5
    $region4: #{tpu_custom_call.1} parent=1 // pred_region
      %29 = vsyncadd [#allocation3], 0
      %s30 = sshll.u32 %s0, 4
      %s31 = int_to_ptr.hbm [resolvable:$true] %s30
      %s32 = sshll.u32 [#allocation2], 4
      %s33 = int_to_ptr.vmem [resolvable:$true] %s32
      %38 = dma.hbm_to_vmem [thread:$0]  %s31, 128, %s33, [#allocation3], 64, 64, 4
    $region5: #{tpu_custom_call.1} parent=1 // pred_fallthru
      _
    // Predicated region
    $region6: #{tpu_custom_call.1} parent=1 // pred_check
      _
    $region7: #{tpu_custom_call.1} parent=1 // pred_check_branch
      %40 = sbr.rel (0) target = $region9
    $region8: #{tpu_custom_call.1} parent=1 // pred_region
      %42 = vsyncadd [#allocation6], 0
      %s43 = sshll.u32 %s1, 4
      %s44 = int_to_ptr.hbm [resolvable:$true] %s43
      %s45 = sshll.u32 [#allocation5], 4
      %s46 = int_to_ptr.vmem [resolvable:$true] %s45
      %51 = dma.hbm_to_vmem [thread:$0]  %s44, 128, %s46, [#allocation6], 64, 64, 4
    $region9: #{tpu_custom_call.1} parent=1 // pred_fallthru
      _
    // Predicated region
    $region10: #{tpu_custom_call.1} parent=1 // pred_check
      _
    $region11: #{tpu_custom_call.1} parent=1 // pred_check_branch
      %53 = sbr.rel (0) target = $region13
    $region12: #{tpu_custom_call.1} parent=1 // pred_region
      %55 = vsyncadd [#allocation6], 0
      %s56 = sshll.u32 %s2, 4
      %s57 = int_to_ptr.hbm [resolvable:$true] %s56
      %s58 = sshll.u32 [#allocation7], 4
      %s59 = int_to_ptr.vmem [resolvable:$true] %s58
      %64 = dma.hbm_to_vmem [thread:$0]  %s57, 256, %s59, [#allocation6], 128, 128, 8
    $region13: #{tpu_custom_call.1} parent=1 // pred_fallthru
      _
    // Predicated region
    $region14: #{tpu_custom_call.1} parent=1 // pred_check
      _
    $region15: #{tpu_custom_call.1} parent=1 // pred_check_branch
      %66 = sbr.rel (0) target = $region17
    $region16: #{tpu_custom_call.1} parent=1 // pred_region
      %68 = vsyncadd [#allocation9], 0
      %s69 = sshll.u32 %s3, 4
      %s70 = int_to_ptr.hbm [resolvable:$true] %s69
      %s71 = sshll.u32 [#allocation8], 4
      %s72 = int_to_ptr.vmem [resolvable:$true] %s71
      %77 = dma.hbm_to_vmem [thread:$0]  %s70, 256, %s72, [#allocation9], 128, 128, 8
    $region17: #{tpu_custom_call.1} parent=1 // pred_fallthru
      _
    // Predicated region
    $region18: #{tpu_custom_call.1} parent=1 // pred_check
      _
    $region19: #{tpu_custom_call.1} parent=1 // pred_check_branch
      %79 = sbr.rel (0) target = $region21
    $region20: #{tpu_custom_call.1} parent=1 // pred_region
      %81 = vsyncadd [#allocation9], 0
      %s82 = sshll.u32 %s4, 4
      %s83 = int_to_ptr.hbm [resolvable:$true] %s82
      %s84 = sshll.u32 [#allocation10], 4
      %s85 = int_to_ptr.vmem [resolvable:$true] %s84
      %90 = dma.hbm_to_vmem [thread:$0]  %s83, 5120, %s85, [#allocation9], 320, 320, 20
    $region21: #{tpu_custom_call.1} parent=1 // pred_fallthru
      _
    // Predicated region
    $region22: #{tpu_custom_call.1} parent=1 // pred_check
      _
    $region23: #{tpu_custom_call.1} parent=1 // pred_check_branch
      %92 = sbr.rel (0) target = $region25
    $region24: #{tpu_custom_call.1} parent=1 // pred_region
      %94 = vsyncadd [#allocation12], 0
      %s95 = sshll.u32 %s5, 4
      %s96 = int_to_ptr.hbm [resolvable:$true] %s95
      %s97 = sshll.u32 [#allocation11], 4
      %s98 = int_to_ptr.vmem [resolvable:$true] %s97
      %103 = dma.hbm_to_vmem [thread:$0]  %s96, 5120, %s98, [#allocation12], 320, 320, 20
    $region25: #{tpu_custom_call.1} parent=1 // pred_fallthru
      _
    // Predicated region
    $region26: #{tpu_custom_call.1} parent=1 // pred_check
      _
    $region27: #{tpu_custom_call.1} parent=1 // pred_check_branch
      %105 = sbr.rel (0) target = $region29
    $region28: #{tpu_custom_call.1} parent=1 // pred_region
      _
    $region29: #{tpu_custom_call.1} parent=1 // pred_fallthru
      _
    // Predicated region
    $region30: #{tpu_custom_call.1} parent=1 // pred_check
      _
    $region31: #{tpu_custom_call.1} parent=1 // pred_check_branch
      %107 = sbr.rel (0) target = $region33
    $region32: #{tpu_custom_call.1} parent=1 // pred_region
      _
    $region33: #{tpu_custom_call.1} parent=1 // pred_fallthru
      _
    // Predicated region
    $region34: #{tpu_custom_call.1} parent=1 // pred_check
      _
    $region35: #{tpu_custom_call.1} parent=1 // pred_check_branch
      %109 = sbr.rel (0) target = $region37
    $region36: #{tpu_custom_call.1} parent=1 // pred_region
      _
    $region37: #{tpu_custom_call.1} parent=1 // pred_fallthru
      _
    // Predicated region
    $region38: #{tpu_custom_call.1} parent=1 // pred_check
      _
    $region39: #{tpu_custom_call.1} parent=1 // pred_check_branch
      %111 = sbr.rel (0) target = $region41
    $region40: #{tpu_custom_call.1} parent=1 // pred_region
      %113 = dma.done [#allocation3], 128
    $region41: #{tpu_custom_call.1} parent=1 // pred_fallthru
      _
    // Predicated region
    $region42: #{tpu_custom_call.1} parent=1 // pred_check
      _
    $region43: #{tpu_custom_call.1} parent=1 // pred_check_branch
      %115 = sbr.rel (0) target = $region45
    $region44: #{tpu_custom_call.1} parent=1 // pred_region
      %117 = dma.done [#allocation6], 128
    $region45: #{tpu_custom_call.1} parent=1 // pred_fallthru
      _
    // Predicated region
    $region46: #{tpu_custom_call.1} parent=1 // pred_check
      _
    $region47: #{tpu_custom_call.1} parent=1 // pred_check_branch
      %119 = sbr.rel (0) target = $region49
    $region48: #{tpu_custom_call.1} parent=1 // pred_region
      %121 = dma.done [#allocation6], 256
    $region49: #{tpu_custom_call.1} parent=1 // pred_fallthru
      _
    // Predicated region
    $region50: #{tpu_custom_call.1} parent=1 // pred_check
      _
    $region51: #{tpu_custom_call.1} parent=1 // pred_check_branch
      %123 = sbr.rel (0) target = $region53
    $region52: #{tpu_custom_call.1} parent=1 // pred_region
      %125 = dma.done [#allocation9], 256
    $region53: #{tpu_custom_call.1} parent=1 // pred_fallthru
      _
    // Predicated region
    $region54: #{tpu_custom_call.1} parent=1 // pred_check
      _
    $region55: #{tpu_custom_call.1} parent=1 // pred_check_branch
      %127 = sbr.rel (0) target = $region57
    $region56: #{tpu_custom_call.1} parent=1 // pred_region
      %129 = dma.done [#allocation9], 5120
    $region57: #{tpu_custom_call.1} parent=1 // pred_fallthru
      _
    // Predicated region
    $region58: #{tpu_custom_call.1} parent=1 // pred_check
      _
    $region59: #{tpu_custom_call.1} parent=1 // pred_check_branch
      %131 = sbr.rel (0) target = $region61
    $region60: #{tpu_custom_call.1} parent=1 // pred_region
      %133 = dma.done [#allocation12], 5120
    $region61: #{tpu_custom_call.1} parent=1 // pred_fallthru
      _
    %v135 = vld [vmem:[#allocation2] sm:$0xf]
    %v136 = vld [vmem:[#allocation2 + $0x4] sm:$0xf]
    %v137 = vld [vmem:[#allocation10] sm:$0xff]
    %v138 = vld [vmem:[#allocation10 + $0x8] sm:$0xff]
    %v139 = vld [vmem:[#allocation10 + $0x10] sm:$0xf]
    %v140 = vld [vmem:[#allocation10 + $0x14] sm:$0xff]
    %v141 = vld [vmem:[#allocation10 + $0x1c] sm:$0xff]
    %v142 = vld [vmem:[#allocation10 + $0x24] sm:$0xf]
    %v143 = vld [vmem:[#allocation10 + $0x28] sm:$0xff]
    %v144 = vld [vmem:[#allocation10 + $0x30] sm:$0xff]
    %v145 = vld [vmem:[#allocation10 + $0x38] sm:$0xf]
    %v146 = vld [vmem:[#allocation10 + $0x3c] sm:$0xff]
    %v147 = vld [vmem:[#allocation10 + $0x44] sm:$0xff]
    %v148 = vld [vmem:[#allocation10 + $0x4c] sm:$0xf]
    %v149 = vld [vmem:[#allocation10 + $0x50] sm:$0xff]
    %v150 = vld [vmem:[#allocation10 + $0x58] sm:$0xff]
    %v151 = vld [vmem:[#allocation10 + $0x60] sm:$0xf]
    %v152 = vld [vmem:[#allocation10 + $0x64] sm:$0xff]
    %v153 = vld [vmem:[#allocation10 + $0x6c] sm:$0xff]
    %v154 = vld [vmem:[#allocation10 + $0x74] sm:$0xf]
    %v155 = vld [vmem:[#allocation10 + $0x78] sm:$0xff]
    %v156 = vld [vmem:[#allocation10 + $0x80] sm:$0xff]
    %v157 = vld [vmem:[#allocation10 + $0x88] sm:$0xf]
    %v158 = vld [vmem:[#allocation10 + $0x8c] sm:$0xff]
    %v159 = vld [vmem:[#allocation10 + $0x94] sm:$0xff]
    %v160 = vld [vmem:[#allocation10 + $0x9c] sm:$0xf]
    %v161 = vld [vmem:[#allocation10 + $0xa0] sm:$0xff]
    %v162 = vld [vmem:[#allocation10 + $0xa8] sm:$0xff]
    %v163 = vld [vmem:[#allocation10 + $0xb0] sm:$0xf]
    %v164 = vld [vmem:[#allocation10 + $0xb4] sm:$0xff]
    %v165 = vld [vmem:[#allocation10 + $0xbc] sm:$0xff]
    %v166 = vld [vmem:[#allocation10 + $0xc4] sm:$0xf]
    %v167 = vld [vmem:[#allocation10 + $0xc8] sm:$0xff]
    %v168 = vld [vmem:[#allocation10 + $0xd0] sm:$0xff]
    %v169 = vld [vmem:[#allocation10 + $0xd8] sm:$0xf]
    %v170 = vld [vmem:[#allocation10 + $0xdc] sm:$0xff]
    %v171 = vld [vmem:[#allocation10 + $0xe4] sm:$0xff]
    %v172 = vld [vmem:[#allocation10 + $0xec] sm:$0xf]
    %v173 = vld [vmem:[#allocation10 + $0xf0] sm:$0xff]
    %v174 = vld [vmem:[#allocation10 + $0xf8] sm:$0xff]
    %v175 = vld [vmem:[#allocation10 + $0x100] sm:$0xf]
    %v176 = vld [vmem:[#allocation10 + $0x104] sm:$0xff]
    %v177 = vld [vmem:[#allocation10 + $0x10c] sm:$0xff]
    %v178 = vld [vmem:[#allocation10 + $0x114] sm:$0xf]
    %v179 = vld [vmem:[#allocation10 + $0x118] sm:$0xff]
    %v180 = vld [vmem:[#allocation10 + $0x120] sm:$0xff]
    %v181 = vld [vmem:[#allocation10 + $0x128] sm:$0xf]
    %v182 = vld [vmem:[#allocation10 + $0x12c] sm:$0xff]
    %v183 = vld [vmem:[#allocation10 + $0x134] sm:$0xff]
    %v184 = vld [vmem:[#allocation10 + $0x13c] sm:$0xf]
    %v185 = vld [vmem:[#allocation5] sm:$0xf]
    %v186 = vld [vmem:[#allocation5 + $0x4] sm:$0xf]
    %v187 = vld [vmem:[#allocation11] sm:$0xff]
    %v188 = vld [vmem:[#allocation11 + $0x8] sm:$0xff]
    %v189 = vld [vmem:[#allocation11 + $0x10] sm:$0xf]
    %v190 = vld [vmem:[#allocation11 + $0x14] sm:$0xff]
    %v191 = vld [vmem:[#allocation11 + $0x1c] sm:$0xff]
    %v192 = vld [vmem:[#allocation11 + $0x24] sm:$0xf]
    %v193 = vld [vmem:[#allocation11 + $0x28] sm:$0xff]
    %v194 = vld [vmem:[#allocation11 + $0x30] sm:$0xff]
    %v195 = vld [vmem:[#allocation11 + $0x38] sm:$0xf]
    %v196 = vld [vmem:[#allocation11 + $0x3c] sm:$0xff]
    %v197 = vld [vmem:[#allocation11 + $0x44] sm:$0xff]
    %v198 = vld [vmem:[#allocation11 + $0x4c] sm:$0xf]
    %v199 = vld [vmem:[#allocation11 + $0x50] sm:$0xff]
    %v200 = vld [vmem:[#allocation11 + $0x58] sm:$0xff]
    %v201 = vld [vmem:[#allocation11 + $0x60] sm:$0xf]
    %v202 = vld [vmem:[#allocation11 + $0x64] sm:$0xff]
    %v203 = vld [vmem:[#allocation11 + $0x6c] sm:$0xff]
    %v204 = vld [vmem:[#allocation11 + $0x74] sm:$0xf]
    %v205 = vld [vmem:[#allocation11 + $0x78] sm:$0xff]
    %v206 = vld [vmem:[#allocation11 + $0x80] sm:$0xff]
    %v207 = vld [vmem:[#allocation11 + $0x88] sm:$0xf]
    %v208 = vld [vmem:[#allocation11 + $0x8c] sm:$0xff]
    %v209 = vld [vmem:[#allocation11 + $0x94] sm:$0xff]
    %v210 = vld [vmem:[#allocation11 + $0x9c] sm:$0xf]
    %v211 = vld [vmem:[#allocation11 + $0xa0] sm:$0xff]
    %v212 = vld [vmem:[#allocation11 + $0xa8] sm:$0xff]
    %v213 = vld [vmem:[#allocation11 + $0xb0] sm:$0xf]
    %v214 = vld [vmem:[#allocation11 + $0xb4] sm:$0xff]
    %v215 = vld [vmem:[#allocation11 + $0xbc] sm:$0xff]
    %v216 = vld [vmem:[#allocation11 + $0xc4] sm:$0xf]
    %v217 = vld [vmem:[#allocation11 + $0xc8] sm:$0xff]
    %v218 = vld [vmem:[#allocation11 + $0xd0] sm:$0xff]
    %v219 = vld [vmem:[#allocation11 + $0xd8] sm:$0xf]
    %v220 = vld [vmem:[#allocation11 + $0xdc] sm:$0xff]
    %v221 = vld [vmem:[#allocation11 + $0xe4] sm:$0xff]
    %v222 = vld [vmem:[#allocation11 + $0xec] sm:$0xf]
    %v223 = vld [vmem:[#allocation11 + $0xf0] sm:$0xff]
    %v224 = vld [vmem:[#allocation11 + $0xf8] sm:$0xff]
    %v225 = vld [vmem:[#allocation11 + $0x100] sm:$0xf]
    %v226 = vld [vmem:[#allocation11 + $0x104] sm:$0xff]
    %v227 = vld [vmem:[#allocation11 + $0x10c] sm:$0xff]
    %v228 = vld [vmem:[#allocation11 + $0x114] sm:$0xf]
    %v229 = vld [vmem:[#allocation11 + $0x118] sm:$0xff]
    %v230 = vld [vmem:[#allocation11 + $0x120] sm:$0xff]
    %v231 = vld [vmem:[#allocation11 + $0x128] sm:$0xf]
    %v232 = vld [vmem:[#allocation11 + $0x12c] sm:$0xff]
    %v233 = vld [vmem:[#allocation11 + $0x134] sm:$0xff]
    %v234 = vld [vmem:[#allocation11 + $0x13c] sm:$0xf]
    %v237 = vunpack.c.l.b16 %v185
    %v238 = vunpack.c.l.b16 %v186
    %v239 = vpack.c.b16 %v238, %v237
    %v289 = vunpack.c.l.b16 %v187
    %v290 = vunpack.c.h.b16 %v187
    %v291 = vunpack.c.l.b16 %v188
    %v292 = vunpack.c.h.b16 %v188
    %v293 = vunpack.c.l.b16 %v189
    %v294 = vunpack.c.l.b16 %v190
    %v295 = vunpack.c.h.b16 %v190
    %v296 = vunpack.c.l.b16 %v191
    %v297 = vunpack.c.h.b16 %v191
    %v298 = vunpack.c.l.b16 %v192
    %v299 = vunpack.c.l.b16 %v193
    %v300 = vunpack.c.h.b16 %v193
    %v301 = vunpack.c.l.b16 %v194
    %v302 = vunpack.c.h.b16 %v194
    %v303 = vunpack.c.l.b16 %v195
    %v304 = vunpack.c.l.b16 %v196
    %v305 = vunpack.c.h.b16 %v196
    %v306 = vunpack.c.l.b16 %v197
    %v307 = vunpack.c.h.b16 %v197
    %v308 = vunpack.c.l.b16 %v198
    %v309 = vunpack.c.l.b16 %v199
    %v310 = vunpack.c.h.b16 %v199
    %v311 = vunpack.c.l.b16 %v200
    %v312 = vunpack.c.h.b16 %v200
    %v313 = vunpack.c.l.b16 %v201
    %v314 = vunpack.c.l.b16 %v202
    %v315 = vunpack.c.h.b16 %v202
    %v316 = vunpack.c.l.b16 %v203
    %v317 = vunpack.c.h.b16 %v203
    %v318 = vunpack.c.l.b16 %v204
    %v319 = vunpack.c.l.b16 %v205
    %v320 = vunpack.c.h.b16 %v205
    %v321 = vunpack.c.l.b16 %v206
    %v322 = vunpack.c.h.b16 %v206
    %v323 = vunpack.c.l.b16 %v207
    %v324 = vunpack.c.l.b16 %v208
    %v325 = vunpack.c.h.b16 %v208
    %v326 = vunpack.c.l.b16 %v209
    %v327 = vunpack.c.h.b16 %v209
    %v328 = vunpack.c.l.b16 %v210
    %v329 = vunpack.c.l.b16 %v211
    %v330 = vunpack.c.h.b16 %v211
    %v331 = vunpack.c.l.b16 %v212
    %v332 = vunpack.c.h.b16 %v212
    %v333 = vunpack.c.l.b16 %v213
    %v334 = vunpack.c.l.b16 %v214
    %v335 = vunpack.c.h.b16 %v214
    %v336 = vunpack.c.l.b16 %v215
    %v337 = vunpack.c.h.b16 %v215
    %v338 = vunpack.c.l.b16 %v216
    %v339 = vunpack.c.l.b16 %v217
    %v340 = vunpack.c.h.b16 %v217
    %v341 = vunpack.c.l.b16 %v218
    %v342 = vunpack.c.h.b16 %v218
    %v343 = vunpack.c.l.b16 %v219
    %v344 = vunpack.c.l.b16 %v220
    %v345 = vunpack.c.h.b16 %v220
    %v346 = vunpack.c.l.b16 %v221
    %v347 = vunpack.c.h.b16 %v221
    %v348 = vunpack.c.l.b16 %v222
    %v349 = vunpack.c.l.b16 %v223
    %v350 = vunpack.c.h.b16 %v223
    %v351 = vunpack.c.l.b16 %v224
    %v352 = vunpack.c.h.b16 %v224
    %v353 = vunpack.c.l.b16 %v225
    %v354 = vunpack.c.l.b16 %v226
    %v355 = vunpack.c.h.b16 %v226
    %v356 = vunpack.c.l.b16 %v227
    %v357 = vunpack.c.h.b16 %v227
    %v358 = vunpack.c.l.b16 %v228
    %v359 = vunpack.c.l.b16 %v229
    %v360 = vunpack.c.h.b16 %v229
    %v361 = vunpack.c.l.b16 %v230
    %v362 = vunpack.c.h.b16 %v230
    %v363 = vunpack.c.l.b16 %v231
    %v364 = vunpack.c.l.b16 %v232
    %v365 = vunpack.c.h.b16 %v232
    %v366 = vunpack.c.l.b16 %v233
    %v367 = vunpack.c.h.b16 %v233
    %v368 = vunpack.c.l.b16 %v234
    %v369 = vpack.c.b16 %v294, %v289
    %v370 = vpack.c.b16 %v295, %v290
    %v371 = vpack.c.b16 %v296, %v291
    %v372 = vpack.c.b16 %v297, %v292
    %v373 = vpack.c.b16 %v298, %v293
    %v374 = vpack.c.b16 %v304, %v299
    %v375 = vpack.c.b16 %v305, %v300
    %v376 = vpack.c.b16 %v306, %v301
    %v377 = vpack.c.b16 %v307, %v302
    %v378 = vpack.c.b16 %v308, %v303
    %v379 = vpack.c.b16 %v314, %v309
    %v380 = vpack.c.b16 %v315, %v310
    %v381 = vpack.c.b16 %v316, %v311
    %v382 = vpack.c.b16 %v317, %v312
    %v383 = vpack.c.b16 %v318, %v313
    %v384 = vpack.c.b16 %v324, %v319
    %v385 = vpack.c.b16 %v325, %v320
    %v386 = vpack.c.b16 %v326, %v321
    %v387 = vpack.c.b16 %v327, %v322
    %v388 = vpack.c.b16 %v328, %v323
    %v389 = vpack.c.b16 %v334, %v329
    %v390 = vpack.c.b16 %v335, %v330
    %v391 = vpack.c.b16 %v336, %v331
    %v392 = vpack.c.b16 %v337, %v332
    %v393 = vpack.c.b16 %v338, %v333
    %v394 = vpack.c.b16 %v344, %v339
    %v395 = vpack.c.b16 %v345, %v340
    %v396 = vpack.c.b16 %v346, %v341
    %v397 = vpack.c.b16 %v347, %v342
    %v398 = vpack.c.b16 %v348, %v343
    %v399 = vpack.c.b16 %v354, %v349
    %v400 = vpack.c.b16 %v355, %v350
    %v401 = vpack.c.b16 %v356, %v351
    %v402 = vpack.c.b16 %v357, %v352
    %v403 = vpack.c.b16 %v358, %v353
    %v404 = vpack.c.b16 %v364, %v359
    %v405 = vpack.c.b16 %v365, %v360
    %v406 = vpack.c.b16 %v366, %v361
    %v407 = vpack.c.b16 %v367, %v362
    %v408 = vpack.c.b16 %v368, %v363
    %449 = vmatpush.bf16.msra.mxu0 %v404
    %450 = vmatpush.bf16.msra.mxu0 %v399
    %451 = vmatpush.bf16.msra.mxu0 %v394
    %452 = vmatpush.bf16.msra.mxu0 %v389
    %453 = vmatpush.bf16.msra.mxu0 %v384
    %454 = vmatpush.bf16.msra.mxu0 %v379
    %455 = vmatpush.bf16.msra.mxu0 %v374
    %456 = vmatpush.bf16.msra.mxu0 %v369
    %457 = vmatmul.bf16.gmra.mxu0 %v239
    %v458 = vpop.f32.mrf.mxu0
    %v459 = vadd.f32 0.0, %v458
    %v460 = vpop.f32.mrf.mxu0
    %v461 = vadd.f32 0.0, %v460
    %462 = vdwg.mxu0
    %463 = vmatpush.bf16.msra.mxu0 %v405
    %464 = vmatpush.bf16.msra.mxu0 %v400
    %465 = vmatpush.bf16.msra.mxu0 %v395
    %466 = vmatpush.bf16.msra.mxu0 %v390
    %467 = vmatpush.bf16.msra.mxu0 %v385
    %468 = vmatpush.bf16.msra.mxu0 %v380
    %469 = vmatpush.bf16.msra.mxu0 %v375
    %470 = vmatpush.bf16.msra.mxu0 %v370
    %471 = vmatmul.bf16.gmra.mxu0 %v239
    %v472 = vpop.f32.mrf.mxu0
    %v473 = vadd.f32 0.0, %v472
    %v474 = vpop.f32.mrf.mxu0
    %v475 = vadd.f32 0.0, %v474
    %476 = vdwg.mxu0
    %477 = vmatpush.bf16.msra.mxu0 %v406
    %478 = vmatpush.bf16.msra.mxu0 %v401
    %479 = vmatpush.bf16.msra.mxu0 %v396
    %480 = vmatpush.bf16.msra.mxu0 %v391
    %481 = vmatpush.bf16.msra.mxu0 %v386
    %482 = vmatpush.bf16.msra.mxu0 %v381
    %483 = vmatpush.bf16.msra.mxu0 %v376
    %484 = vmatpush.bf16.msra.mxu0 %v371
    %485 = vmatmul.bf16.gmra.mxu0 %v239
    %v486 = vpop.f32.mrf.mxu0
    %v487 = vadd.f32 0.0, %v486
    %v488 = vpop.f32.mrf.mxu0
    %v489 = vadd.f32 0.0, %v488
    %490 = vdwg.mxu0
    %491 = vmatpush.bf16.msra.mxu0 %v407
    %492 = vmatpush.bf16.msra.mxu0 %v402
    %493 = vmatpush.bf16.msra.mxu0 %v397
    %494 = vmatpush.bf16.msra.mxu0 %v392
    %495 = vmatpush.bf16.msra.mxu0 %v387
    %496 = vmatpush.bf16.msra.mxu0 %v382
    %497 = vmatpush.bf16.msra.mxu0 %v377
    %498 = vmatpush.bf16.msra.mxu0 %v372
    %499 = vmatmul.bf16.gmra.mxu0 %v239
    %v500 = vpop.f32.mrf.mxu0
    %v501 = vadd.f32 0.0, %v500
    %v502 = vpop.f32.mrf.mxu0
    %v503 = vadd.f32 0.0, %v502
    %504 = vdwg.mxu0
    %505 = vmatpush.bf16.msra.mxu0 %v408
    %506 = vmatpush.bf16.msra.mxu0 %v403
    %507 = vmatpush.bf16.msra.mxu0 %v398
    %508 = vmatpush.bf16.msra.mxu0 %v393
    %509 = vmatpush.bf16.msra.mxu0 %v388
    %510 = vmatpush.bf16.msra.mxu0 %v383
    %511 = vmatpush.bf16.msra.mxu0 %v378
    %512 = vmatpush.bf16.msra.mxu0 %v373
    %513 = vmatmul.bf16.gmra.mxu0 %v239
    %v514 = vpop.f32.mrf.mxu0
    %v515 = vadd.f32 0.0, %v514
    %v516 = vpop.f32.mrf.mxu0
    %v517 = vadd.f32 0.0, %v516
    %518 = vdwg.mxu0
    %v521 = vunpack.c.l.b16 %v135
    %v522 = vunpack.c.l.b16 %v136
    %v523 = vpack.c.b16 %v522, %v521
    %v573 = vunpack.c.l.b16 %v137
    %v574 = vunpack.c.h.b16 %v137
    %v575 = vunpack.c.l.b16 %v138
    %v576 = vunpack.c.h.b16 %v138
    %v577 = vunpack.c.l.b16 %v139
    %v578 = vunpack.c.l.b16 %v140
    %v579 = vunpack.c.h.b16 %v140
    %v580 = vunpack.c.l.b16 %v141
    %v581 = vunpack.c.h.b16 %v141
    %v582 = vunpack.c.l.b16 %v142
    %v583 = vunpack.c.l.b16 %v143
    %v584 = vunpack.c.h.b16 %v143
    %v585 = vunpack.c.l.b16 %v144
    %v586 = vunpack.c.h.b16 %v144
    %v587 = vunpack.c.l.b16 %v145
    %v588 = vunpack.c.l.b16 %v146
    %v589 = vunpack.c.h.b16 %v146
    %v590 = vunpack.c.l.b16 %v147
    %v591 = vunpack.c.h.b16 %v147
    %v592 = vunpack.c.l.b16 %v148
    %v593 = vunpack.c.l.b16 %v149
    %v594 = vunpack.c.h.b16 %v149
    %v595 = vunpack.c.l.b16 %v150
    %v596 = vunpack.c.h.b16 %v150
    %v597 = vunpack.c.l.b16 %v151
    %v598 = vunpack.c.l.b16 %v152
    %v599 = vunpack.c.h.b16 %v152
    %v600 = vunpack.c.l.b16 %v153
    %v601 = vunpack.c.h.b16 %v153
    %v602 = vunpack.c.l.b16 %v154
    %v603 = vunpack.c.l.b16 %v155
    %v604 = vunpack.c.h.b16 %v155
    %v605 = vunpack.c.l.b16 %v156
    %v606 = vunpack.c.h.b16 %v156
    %v607 = vunpack.c.l.b16 %v157
    %v608 = vunpack.c.l.b16 %v158
    %v609 = vunpack.c.h.b16 %v158
    %v610 = vunpack.c.l.b16 %v159
    %v611 = vunpack.c.h.b16 %v159
    %v612 = vunpack.c.l.b16 %v160
    %v613 = vunpack.c.l.b16 %v161
    %v614 = vunpack.c.h.b16 %v161
    %v615 = vunpack.c.l.b16 %v162
    %v616 = vunpack.c.h.b16 %v162
    %v617 = vunpack.c.l.b16 %v163
    %v618 = vunpack.c.l.b16 %v164
    %v619 = vunpack.c.h.b16 %v164
    %v620 = vunpack.c.l.b16 %v165
    %v621 = vunpack.c.h.b16 %v165
    %v622 = vunpack.c.l.b16 %v166
    %v623 = vunpack.c.l.b16 %v167
    %v624 = vunpack.c.h.b16 %v167
    %v625 = vunpack.c.l.b16 %v168
    %v626 = vunpack.c.h.b16 %v168
    %v627 = vunpack.c.l.b16 %v169
    %v628 = vunpack.c.l.b16 %v170
    %v629 = vunpack.c.h.b16 %v170
    %v630 = vunpack.c.l.b16 %v171
    %v631 = vunpack.c.h.b16 %v171
    %v632 = vunpack.c.l.b16 %v172
    %v633 = vunpack.c.l.b16 %v173
    %v634 = vunpack.c.h.b16 %v173
    %v635 = vunpack.c.l.b16 %v174
    %v636 = vunpack.c.h.b16 %v174
    %v637 = vunpack.c.l.b16 %v175
    %v638 = vunpack.c.l.b16 %v176
    %v639 = vunpack.c.h.b16 %v176
    %v640 = vunpack.c.l.b16 %v177
    %v641 = vunpack.c.h.b16 %v177
    %v642 = vunpack.c.l.b16 %v178
    %v643 = vunpack.c.l.b16 %v179
    %v644 = vunpack.c.h.b16 %v179
    %v645 = vunpack.c.l.b16 %v180
    %v646 = vunpack.c.h.b16 %v180
    %v647 = vunpack.c.l.b16 %v181
    %v648 = vunpack.c.l.b16 %v182
    %v649 = vunpack.c.h.b16 %v182
    %v650 = vunpack.c.l.b16 %v183
    %v651 = vunpack.c.h.b16 %v183
    %v652 = vunpack.c.l.b16 %v184
    %v653 = vpack.c.b16 %v578, %v573
    %v654 = vpack.c.b16 %v579, %v574
    %v655 = vpack.c.b16 %v580, %v575
    %v656 = vpack.c.b16 %v581, %v576
    %v657 = vpack.c.b16 %v582, %v577
    %v658 = vpack.c.b16 %v588, %v583
    %v659 = vpack.c.b16 %v589, %v584
    %v660 = vpack.c.b16 %v590, %v585
    %v661 = vpack.c.b16 %v591, %v586
    %v662 = vpack.c.b16 %v592, %v587
    %v663 = vpack.c.b16 %v598, %v593
    %v664 = vpack.c.b16 %v599, %v594
    %v665 = vpack.c.b16 %v600, %v595
    %v666 = vpack.c.b16 %v601, %v596
    %v667 = vpack.c.b16 %v602, %v597
    %v668 = vpack.c.b16 %v608, %v603
    %v669 = vpack.c.b16 %v609, %v604
    %v670 = vpack.c.b16 %v610, %v605
    %v671 = vpack.c.b16 %v611, %v606
    %v672 = vpack.c.b16 %v612, %v607
    %v673 = vpack.c.b16 %v618, %v613
    %v674 = vpack.c.b16 %v619, %v614
    %v675 = vpack.c.b16 %v620, %v615
    %v676 = vpack.c.b16 %v621, %v616
    %v677 = vpack.c.b16 %v622, %v617
    %v678 = vpack.c.b16 %v628, %v623
    %v679 = vpack.c.b16 %v629, %v624
    %v680 = vpack.c.b16 %v630, %v625
    %v681 = vpack.c.b16 %v631, %v626
    %v682 = vpack.c.b16 %v632, %v627
    %v683 = vpack.c.b16 %v638, %v633
    %v684 = vpack.c.b16 %v639, %v634
    %v685 = vpack.c.b16 %v640, %v635
    %v686 = vpack.c.b16 %v641, %v636
    %v687 = vpack.c.b16 %v642, %v637
    %v688 = vpack.c.b16 %v648, %v643
    %v689 = vpack.c.b16 %v649, %v644
    %v690 = vpack.c.b16 %v650, %v645
    %v691 = vpack.c.b16 %v651, %v646
    %v692 = vpack.c.b16 %v652, %v647
    %733 = vmatpush.bf16.msra.mxu0 %v688
    %734 = vmatpush.bf16.msra.mxu0 %v683
    %735 = vmatpush.bf16.msra.mxu0 %v678
    %736 = vmatpush.bf16.msra.mxu0 %v673
    %737 = vmatpush.bf16.msra.mxu0 %v668
    %738 = vmatpush.bf16.msra.mxu0 %v663
    %739 = vmatpush.bf16.msra.mxu0 %v658
    %740 = vmatpush.bf16.msra.mxu0 %v653
    %741 = vmatmul.bf16.gmra.mxu0 %v523
    %v742 = vpop.f32.mrf.mxu0
    %v743 = vadd.f32 %v459, %v742
    %v744 = vpop.f32.mrf.mxu0
    %v745 = vadd.f32 %v461, %v744
    %746 = vdwg.mxu0
    %747 = vmatpush.bf16.msra.mxu0 %v689
    %748 = vmatpush.bf16.msra.mxu0 %v684
    %749 = vmatpush.bf16.msra.mxu0 %v679
    %750 = vmatpush.bf16.msra.mxu0 %v674
    %751 = vmatpush.bf16.msra.mxu0 %v669
    %752 = vmatpush.bf16.msra.mxu0 %v664
    %753 = vmatpush.bf16.msra.mxu0 %v659
    %754 = vmatpush.bf16.msra.mxu0 %v654
    %755 = vmatmul.bf16.gmra.mxu0 %v523
    %v756 = vpop.f32.mrf.mxu0
    %v757 = vadd.f32 %v473, %v756
    %v758 = vpop.f32.mrf.mxu0
    %v759 = vadd.f32 %v475, %v758
    %760 = vdwg.mxu0
    %761 = vmatpush.bf16.msra.mxu0 %v690
    %762 = vmatpush.bf16.msra.mxu0 %v685
    %763 = vmatpush.bf16.msra.mxu0 %v680
    %764 = vmatpush.bf16.msra.mxu0 %v675
    %765 = vmatpush.bf16.msra.mxu0 %v670
    %766 = vmatpush.bf16.msra.mxu0 %v665
    %767 = vmatpush.bf16.msra.mxu0 %v660
    %768 = vmatpush.bf16.msra.mxu0 %v655
    %769 = vmatmul.bf16.gmra.mxu0 %v523
    %v770 = vpop.f32.mrf.mxu0
    %v771 = vadd.f32 %v487, %v770
    %v772 = vpop.f32.mrf.mxu0
    %v773 = vadd.f32 %v489, %v772
    %774 = vdwg.mxu0
    %775 = vmatpush.bf16.msra.mxu0 %v691
    %776 = vmatpush.bf16.msra.mxu0 %v686
    %777 = vmatpush.bf16.msra.mxu0 %v681
    %778 = vmatpush.bf16.msra.mxu0 %v676
    %779 = vmatpush.bf16.msra.mxu0 %v671
    %780 = vmatpush.bf16.msra.mxu0 %v666
    %781 = vmatpush.bf16.msra.mxu0 %v661
    %782 = vmatpush.bf16.msra.mxu0 %v656
    %783 = vmatmul.bf16.gmra.mxu0 %v523
    %v784 = vpop.f32.mrf.mxu0
    %v785 = vadd.f32 %v501, %v784
    %v786 = vpop.f32.mrf.mxu0
    %v787 = vadd.f32 %v503, %v786
    %788 = vdwg.mxu0
    %789 = vmatpush.bf16.msra.mxu0 %v692
    %790 = vmatpush.bf16.msra.mxu0 %v687
    %791 = vmatpush.bf16.msra.mxu0 %v682
    %792 = vmatpush.bf16.msra.mxu0 %v677
    %793 = vmatpush.bf16.msra.mxu0 %v672
    %794 = vmatpush.bf16.msra.mxu0 %v667
    %795 = vmatpush.bf16.msra.mxu0 %v662
    %796 = vmatpush.bf16.msra.mxu0 %v657
    %797 = vmatmul.bf16.gmra.mxu0 %v523
    %v798 = vpop.f32.mrf.mxu0
    %v799 = vadd.f32 %v515, %v798
    %v800 = vpop.f32.mrf.mxu0
    %v801 = vadd.f32 %v517, %v800
    %802 = vdwg.mxu0
    %v803 = vld [vmem:[%s6] sm:$0x1f]
    %v805 = vperm.slane %v803, 0
    %v806 = vperm.slane %v803, 1
    %v807 = vperm.slane %v803, 2
    %v808 = vperm.slane %v803, 3
    %v809 = vperm.slane %v803, 4
    %v815 = vadd.f32 %v743, %v805
    %v816 = vadd.f32 %v757, %v806
    %v817 = vadd.f32 %v771, %v807
    %v818 = vadd.f32 %v785, %v808
    %v819 = vadd.f32 %v799, %v809
    %v820 = vadd.f32 %v745, %v805
    %v821 = vadd.f32 %v759, %v806
    %v822 = vadd.f32 %v773, %v807
    %v823 = vadd.f32 %v787, %v808
    %v824 = vadd.f32 %v801, %v809
    %v825 = vpack.c.bf16 %v816, %v815
    %v826 = vpack.c.bf16 %v818, %v817
    %v827 = vpack.c.bf16 %v819, %v819
    %v828 = vpack.c.bf16 %v821, %v820
    %v829 = vpack.c.bf16 %v823, %v822
    %v830 = vpack.c.bf16 %v824, %v824
    %v833 = vrot.slane %v825, 4
    %v834 = vrot.slane %v828, 4
    %v837 = vxor.u32 %v833, 2147516416
    %v838 = vxor.u32 %v834, 2147516416
    %v839 = vunpack.c.l.bf16 %v837
    %v840 = vunpack.c.l.bf16 %v838
    %v841 = vmul.f32 %v839, 1.442695
    %v842 = vpow.pop %v841
    %v843 = vmul.f32 %v840, 1.442695
    %v844 = vpow.pop %v843
    %v845 = vpack.c.bf16 %v842, %v842
    %v846 = vpack.c.bf16 %v844, %v844
    %v847 = vunpack.c.l.bf16 %v845
    %v848 = vunpack.c.l.bf16 %v846
    %v849 = vadd.f32 %v847, 1.0
    %v850 = vadd.f32 %v848, 1.0
    %v851 = vpack.c.bf16 %v849, %v849
    %v852 = vpack.c.bf16 %v850, %v850
    %v853 = vunpack.c.h.bf16 1065369472
    %v854 = vunpack.c.l.bf16 1065369472
    %v855 = vunpack.c.h.bf16 %v851
    %v856 = vunpack.c.l.bf16 %v851
    %v857 = vrcp.pop %v855
    %v858 = vmul.f32 %v853, %v857
    %v859 = vrcp.pop %v856
    %v860 = vmul.f32 %v854, %v859
    %v861 = vpack.c.bf16 %v858, %v860
    %v862 = vunpack.c.h.bf16 %v852
    %v863 = vunpack.c.l.bf16 %v852
    %v864 = vrcp.pop %v862
    %v865 = vmul.f32 %v853, %v864
    %v866 = vrcp.pop %v863
    %v867 = vmul.f32 %v854, %v866
    %v868 = vpack.c.bf16 %v865, %v867
    %v869 = vxor.u32 %v826, 2147516416
    %v870 = vxor.u32 %v829, 2147516416
    %v871 = vunpack.c.l.bf16 %v869
    %v872 = vunpack.c.l.bf16 %v870
    %v873 = vmul.f32 %v871, 1.442695
    %v874 = vpow.pop %v873
    %v875 = vmul.f32 %v872, 1.442695
    %v876 = vpow.pop %v875
    %v877 = vpack.c.bf16 %v874, %v874
    %v878 = vpack.c.bf16 %v876, %v876
    %v879 = vunpack.c.l.bf16 %v877
    %v880 = vunpack.c.l.bf16 %v878
    %v881 = vadd.f32 %v879, 1.0
    %v882 = vadd.f32 %v880, 1.0
    %v883 = vpack.c.bf16 %v881, %v881
    %v884 = vpack.c.bf16 %v882, %v882
    %v885 = vunpack.c.h.bf16 %v883
    %v886 = vunpack.c.l.bf16 %v883
    %v887 = vrcp.pop %v885
    %v888 = vmul.f32 %v853, %v887
    %v889 = vrcp.pop %v886
    %v890 = vmul.f32 %v854, %v889
    %v891 = vpack.c.bf16 %v888, %v890
    %v892 = vunpack.c.h.bf16 %v884
    %v893 = vunpack.c.l.bf16 %v884
    %v894 = vrcp.pop %v892
    %v895 = vmul.f32 %v853, %v894
    %v896 = vrcp.pop %v893
    %v897 = vmul.f32 %v854, %v896
    %v898 = vpack.c.bf16 %v895, %v897
    %v899 = vxor.u32 %v827, 2147516416
    %v900 = vxor.u32 %v830, 2147516416
    %v901 = vunpack.c.l.bf16 %v899
    %v902 = vunpack.c.l.bf16 %v900
    %v903 = vmul.f32 %v901, 1.442695
    %v904 = vpow.pop %v903
    %v905 = vmul.f32 %v902, 1.442695
    %v906 = vpow.pop %v905
    %v907 = vpack.c.bf16 %v904, %v904
    %v908 = vpack.c.bf16 %v906, %v906
    %v909 = vunpack.c.l.bf16 %v907
    %v910 = vunpack.c.l.bf16 %v908
    %v911 = vadd.f32 %v909, 1.0
    %v912 = vadd.f32 %v910, 1.0
    %v913 = vpack.c.bf16 %v911, %v911
    %v914 = vpack.c.bf16 %v912, %v912
    %v915 = vunpack.c.h.bf16 %v913
    %v916 = vunpack.c.l.bf16 %v913
    %v917 = vrcp.pop %v915
    %v918 = vmul.f32 %v853, %v917
    %v919 = vrcp.pop %v916
    %v920 = vmul.f32 %v854, %v919
    %v921 = vpack.c.bf16 %v918, %v920
    %v922 = vunpack.c.h.bf16 %v914
    %v923 = vunpack.c.l.bf16 %v914
    %v924 = vrcp.pop %v922
    %v925 = vmul.f32 %v853, %v924
    %v926 = vrcp.pop %v923
    %v927 = vmul.f32 %v854, %v926
    %v928 = vpack.c.bf16 %v925, %v927
    %v929 = vxor.u32 %v825, 2147516416
    %v930 = vxor.u32 %v828, 2147516416
    %v931 = vunpack.c.l.bf16 %v929
    %v932 = vunpack.c.l.bf16 %v930
    %v933 = vmul.f32 %v931, 1.442695
    %v934 = vpow.pop %v933
    %v935 = vmul.f32 %v932, 1.442695
    %v936 = vpow.pop %v935
    %v937 = vpack.c.bf16 %v934, %v934
    %v938 = vpack.c.bf16 %v936, %v936
    %v939 = vunpack.c.l.bf16 %v937
    %v940 = vunpack.c.l.bf16 %v938
    %v941 = vadd.f32 %v939, 1.0
    %v942 = vadd.f32 %v940, 1.0
    %v943 = vpack.c.bf16 %v941, %v941
    %v944 = vpack.c.bf16 %v942, %v942
    %v945 = vunpack.c.h.bf16 %v943
    %v946 = vunpack.c.l.bf16 %v943
    %v947 = vrcp.pop %v945
    %v948 = vmul.f32 %v853, %v947
    %v949 = vrcp.pop %v946
    %v950 = vmul.f32 %v854, %v949
    %v951 = vpack.c.bf16 %v948, %v950
    %v952 = vunpack.c.h.bf16 %v944
    %v953 = vunpack.c.l.bf16 %v944
    %v954 = vrcp.pop %v952
    %v955 = vmul.f32 %v853, %v954
    %v956 = vrcp.pop %v953
    %v957 = vmul.f32 %v854, %v956
    %v958 = vpack.c.bf16 %v955, %v957
    %v961 = vrot.slane %v826, 4
    %v962 = vrot.slane %v829, 4
    %v965 = vunpack.c.l.bf16 %v961
    %v966 = vunpack.c.l.bf16 %v962
    %v967 = vtanh.pop %v965
    %v968 = vtanh.pop %v966
    %v969 = vpack.c.bf16 %v967, %v967
    %v970 = vpack.c.bf16 %v968, %v968
    %v971 = vld [vmem:[%s7] sm:$0x1]
    %v972 = vld [vmem:[#allocation8] sm:$0xff]
    %v973 = vld [vmem:[#allocation8 + $0x8] sm:$0xff]
    %v974 = vunpack.c.l.bf16 %v861
    %v975 = vunpack.c.l.bf16 %v868
    %v976 = vmul.f32 %v972, %v974
    %v977 = vmul.f32 %v973, %v975
    %v979 = vperm.slane %v971, 0
    %v981 = vmul.f32 %v979, %v976
    %v982 = vmul.f32 %v979, %v977
    %v983 = vld [vmem:[%s8] sm:$0x1]
    %v984 = vld [vmem:[#allocation7] sm:$0xff]
    %v985 = vld [vmem:[#allocation7 + $0x8] sm:$0xff]
    %v986 = vunpack.c.l.bf16 %v891
    %v987 = vunpack.c.l.bf16 %v898
    %v988 = vmul.f32 %v984, %v986
    %v989 = vmul.f32 %v985, %v987
    %v991 = vperm.slane %v983, 0
    %v993 = vmul.f32 %v991, %v988
    %v994 = vmul.f32 %v991, %v989
    %v995 = vadd.f32 %v981, %v993
    %v996 = vadd.f32 %v982, %v994
    %v997 = vunpack.c.l.bf16 %v969
    %v998 = vunpack.c.l.bf16 %v970
    %v999 = vunpack.c.l.bf16 %v951
    %v1000 = vunpack.c.l.bf16 %v958
    %v1001 = vmul.f32 %v997, %v999
    %v1002 = vmul.f32 %v998, %v1000
    %v1003 = vadd.f32 %v995, %v1001
    %v1004 = vadd.f32 %v996, %v1002
    %v1005 = vpack.c.bf16 %v1003, %v1003
    %v1006 = vpack.c.bf16 %v1004, %v1004
    %v1007 = vunpack.c.l.bf16 %v1005
    %v1008 = vunpack.c.l.bf16 %v1006
    %v1009 = vtanh.pop %v1007
    %v1010 = vtanh.pop %v1008
    %v1011 = vpack.c.bf16 %v1009, %v1009
    %v1012 = vpack.c.bf16 %v1010, %v1010
    %v1013 = vunpack.c.l.bf16 %v921
    %v1014 = vunpack.c.l.bf16 %v928
    %v1015 = vunpack.c.l.bf16 %v1011
    %v1016 = vunpack.c.l.bf16 %v1012
    %v1017 = vmul.f32 %v1013, %v1015
    %v1018 = vmul.f32 %v1014, %v1016
    %v1019 = vpack.c.bf16 %v1017, %v1017
    %v1020 = vpack.c.bf16 %v1018, %v1018
    %1021 = vst [vmem:[#allocation13] sm:$0xf] %v1019
    %1022 = vst [vmem:[#allocation13 + $0x4] sm:$0xf] %v1020
    %1023 = vst [vmem:[#allocation14] sm:$0xff] %v1003
    %1024 = vst [vmem:[#allocation14 + $0x8] sm:$0xff] %v1004
    %1025 = vst [vmem:[#allocation16] sm:$0xf] %v861
    %1026 = vst [vmem:[#allocation16 + $0x4] sm:$0xf] %v868
    %1027 = vst [vmem:[#allocation17] sm:$0xf] %v891
    %1028 = vst [vmem:[#allocation17 + $0x4] sm:$0xf] %v898
    %1029 = vst [vmem:[#allocation19] sm:$0xf] %v921
    %1030 = vst [vmem:[#allocation19 + $0x4] sm:$0xf] %v928
    // Predicated region
    $region62: #{tpu_custom_call.1} parent=1 // pred_check
      _
    $region63: #{tpu_custom_call.1} parent=1 // pred_check_branch
      %1032 = sbr.rel (0) target = $region65
    $region64: #{tpu_custom_call.1} parent=1 // pred_region
      %1034 = vsyncadd [#allocation4], 0
      %s1035 = sshll.u32 [#allocation13], 4
      %s1036 = int_to_ptr.vmem [resolvable:$true] %s1035
      %s1037 = sshll.u32 %s9, 4
      %s1038 = int_to_ptr.hbm [resolvable:$true] %s1037
      %1043 = dma.vmem_to_hbm [thread:$0]  %s1036, 128, %s1038, [#allocation4], 64, 64, 4
    $region65: #{tpu_custom_call.1} parent=1 // pred_fallthru
      _
    // Predicated region
    $region66: #{tpu_custom_call.1} parent=1 // pred_check
      _
    $region67: #{tpu_custom_call.1} parent=1 // pred_check_branch
      %1045 = sbr.rel (0) target = $region69
    $region68: #{tpu_custom_call.1} parent=1 // pred_region
      %1047 = vsyncadd [#allocation15], 0
      %s1048 = sshll.u32 [#allocation14], 4
      %s1049 = int_to_ptr.vmem [resolvable:$true] %s1048
      %s1050 = sshll.u32 %s10, 4
      %s1051 = int_to_ptr.hbm [resolvable:$true] %s1050
      %1056 = dma.vmem_to_hbm [thread:$0]  %s1049, 256, %s1051, [#allocation15], 128, 128, 8
    $region69: #{tpu_custom_call.1} parent=1 // pred_fallthru
      _
    // Predicated region
    $region70: #{tpu_custom_call.1} parent=1 // pred_check
      _
    $region71: #{tpu_custom_call.1} parent=1 // pred_check_branch
      %1058 = sbr.rel (0) target = $region73
    $region72: #{tpu_custom_call.1} parent=1 // pred_region
      %1060 = vsyncadd [#allocation15], 0
      %s1061 = sshll.u32 [#allocation16], 4
      %s1062 = int_to_ptr.vmem [resolvable:$true] %s1061
      %s1063 = sshll.u32 %s11, 4
      %s1064 = int_to_ptr.hbm [resolvable:$true] %s1063
      %1069 = dma.vmem_to_hbm [thread:$0]  %s1062, 128, %s1064, [#allocation15], 64, 64, 4
    $region73: #{tpu_custom_call.1} parent=1 // pred_fallthru
      _
    // Predicated region
    $region74: #{tpu_custom_call.1} parent=1 // pred_check
      _
    $region75: #{tpu_custom_call.1} parent=1 // pred_check_branch
      %1071 = sbr.rel (0) target = $region77
    $region76: #{tpu_custom_call.1} parent=1 // pred_region
      %1073 = vsyncadd [#allocation18], 0
      %s1074 = sshll.u32 [#allocation17], 4
      %s1075 = int_to_ptr.vmem [resolvable:$true] %s1074
      %s1076 = sshll.u32 %s12, 4
      %s1077 = int_to_ptr.hbm [resolvable:$true] %s1076
      %1082 = dma.vmem_to_hbm [thread:$0]  %s1075, 128, %s1077, [#allocation18], 64, 64, 4
    $region77: #{tpu_custom_call.1} parent=1 // pred_fallthru
      _
    // Predicated region
    $region78: #{tpu_custom_call.1} parent=1 // pred_check
      _
    $region79: #{tpu_custom_call.1} parent=1 // pred_check_branch
      %1084 = sbr.rel (0) target = $region81
    $region80: #{tpu_custom_call.1} parent=1 // pred_region
      %1086 = vsyncadd [#allocation18], 0
      %s1087 = sshll.u32 [#allocation19], 4
      %s1088 = int_to_ptr.vmem [resolvable:$true] %s1087
      %s1089 = sshll.u32 %s13, 4
      %s1090 = int_to_ptr.hbm [resolvable:$true] %s1089
      %1095 = dma.vmem_to_hbm [thread:$0]  %s1088, 128, %s1090, [#allocation18], 64, 64, 4
    $region81: #{tpu_custom_call.1} parent=1 // pred_fallthru
      _
    // Predicated region
    $region82: #{tpu_custom_call.1} parent=1 // pred_check
      _
    $region83: #{tpu_custom_call.1} parent=1 // pred_check_branch
      %1097 = sbr.rel (0) target = $region85
    $region84: #{tpu_custom_call.1} parent=1 // pred_region
      %1099 = dma.done [#allocation4], 128
    $region85: #{tpu_custom_call.1} parent=1 // pred_fallthru
      _
    // Predicated region
    $region86: #{tpu_custom_call.1} parent=1 // pred_check
      _
    $region87: #{tpu_custom_call.1} parent=1 // pred_check_branch
      %1101 = sbr.rel (0) target = $region89
    $region88: #{tpu_custom_call.1} parent=1 // pred_region
      %1103 = dma.done [#allocation15], 256
    $region89: #{tpu_custom_call.1} parent=1 // pred_fallthru
      _
    // Predicated region
    $region90: #{tpu_custom_call.1} parent=1 // pred_check
      _
    $region91: #{tpu_custom_call.1} parent=1 // pred_check_branch
      %1105 = sbr.rel (0) target = $region93
    $region92: #{tpu_custom_call.1} parent=1 // pred_region
      %1107 = dma.done [#allocation15], 128
    $region93: #{tpu_custom_call.1} parent=1 // pred_fallthru
      _
    // Predicated region
    $region94: #{tpu_custom_call.1} parent=1 // pred_check
      _
    $region95: #{tpu_custom_call.1} parent=1 // pred_check_branch
      %1109 = sbr.rel (0) target = $region97
    $region96: #{tpu_custom_call.1} parent=1 // pred_region
      %1111 = dma.done [#allocation18], 128
    $region97: #{tpu_custom_call.1} parent=1 // pred_fallthru
      _
    // Predicated region
    $region98: #{tpu_custom_call.1} parent=1 // pred_check
      _
    $region99: #{tpu_custom_call.1} parent=1 // pred_check_branch
      %1113 = sbr.rel (0) target = $region101
    $region100: #{tpu_custom_call.1} parent=1 // pred_region
      %1115 = dma.done [#allocation18], 128
    $region101: #{tpu_custom_call.1} parent=1 // pred_fallthru
      _
    %1116 = vsyncpa [#allocation3], 1
    %1117 = vsyncpa [#allocation6], 1
    %1118 = vsyncpa [#allocation9], 1
    %1119 = vsyncpa [#allocation12], 1
    %1120 = vsyncpa [#allocation4], 1
    %1121 = vsyncpa [#allocation15], 1
    %1122 = vsyncpa [#allocation18], 1

// kernel: tpu_custom_call.1
$region0: #{tpu_custom_call.1}
  #allocation0 [shape = 'u32[]', space=smem, size = 0x4, offset = 0x4, fixed_abs, tag = 'smem constant byte address 0x4 - core index']
  #allocation1 [shape = 'u32[72,128]{1,0:T(1,128)}', space=vmem, size = 0x9000, scoped, tag = 'internal scratch']
  %s0 = inlined_call_operand.hbm [shape: bf16[16,128], index: 0, kind: input, shape index: {}]
  %s1 = inlined_call_operand.hbm [shape: bf16[16,128], index: 1, kind: input, shape index: {}]
  %s2 = inlined_call_operand.hbm [shape: f32[16,128], index: 2, kind: input, shape index: {}]
  %s3 = inlined_call_operand.hbm [shape: f32[16,128], index: 3, kind: input, shape index: {}]
  %s4 = inlined_call_operand.hbm [shape: bf16[128,640], index: 4, kind: input, shape index: {}]
  %s5 = inlined_call_operand.hbm [shape: bf16[128,640], index: 5, kind: input, shape index: {}]
  %s6 = inlined_call_operand.vmem [shape: f32[1,640], index: 6, kind: input, shape index: {}]
  %s7 = inlined_call_operand.vmem [shape: f32[1,128], index: 7, kind: input, shape index: {}]
  %s8 = inlined_call_operand.vmem [shape: f32[1,128], index: 8, kind: input, shape index: {}]
  %s9 = inlined_call_operand.hbm [shape: bf16[16,128], index: 9, kind: output, shape index: {0}]
  %s10 = inlined_call_operand.hbm [shape: f32[16,128], index: 10, kind: output, shape index: {1}]
  %s11 = inlined_call_operand.hbm [shape: bf16[16,128], index: 11, kind: output, shape index: {2}]
  %s12 = inlined_call_operand.hbm [shape: bf16[16,128], index: 12, kind: output, shape index: {3}]
  %s13 = inlined_call_operand.hbm [shape: bf16[16,128], index: 13, kind: output, shape index: {4}]
  %14 = xla_tuple %s9, %s10, %s11, %s12, %s13
  %s15 = sld [smem:[#allocation0]]
  $region102: #{tpu_custom_call.1} parent=0
    _
  %s17 = ssub.s32 1, %s15
  %s18 = scalar_select 0, %s17, %s15
  $region1: #{tpu_custom_call.1} parent=0
    #allocation2 [shape = 'u8[4096]{0}', space=vmem, size = 0x1000, scoped, tag = 'input window, operand 0, single buffered']
    #allocation3 [shape = 's32[1]{0}', space=sflag, size = 0x4, scoped, tag = 'scoped memory for tpu_custom_call.1']
    #allocation4 [shape = 's32[1]{0}', space=sflag, size = 0x4, scoped, tag = 'scoped memory for tpu_custom_call.1']
    #allocation5 [shape = 'u8[4096]{0}', space=vmem, size = 0x1000, scoped, tag = 'input window, operand 1, single buffered']
    #allocation6 [shape = 's32[1]{0}', space=sflag, size = 0x4, scoped, tag = 'scoped memory for tpu_custom_call.1']
    #allocation7 [shape = 'u8[8192]{0}', space=vmem, size = 0x2000, scoped, tag = 'input window, operand 2, single buffered']
    #allocation8 [shape = 'u8[8192]{0}', space=vmem, size = 0x2000, scoped, tag = 'input window, operand 3, single buffered']
    #allocation9 [shape = 's32[1]{0}', space=sflag, size = 0x4, scoped, tag = 'scoped memory for tpu_custom_call.1']
    #allocation10 [shape = 'u8[163840]{0}', space=vmem, size = 0x28000, scoped, tag = 'input window, operand 4, single buffered']
    #allocation11 [shape = 'u8[163840]{0}', space=vmem, size = 0x28000, scoped, tag = 'input window, operand 5, single buffered']
    #allocation12 [shape = 's32[1]{0}', space=sflag, size = 0x4, scoped, tag = 'scoped memory for tpu_custom_call.1']
    #allocation13 [shape = 'u8[4096]{0}', space=vmem, size = 0x1000, scoped, tag = 'output window, operand 0, single buffered']
    #allocation14 [shape = 'u8[8192]{0}', space=vmem, size = 0x2000, scoped, tag = 'output window, operand 1, single buffered']
    #allocation15 [shape = 's32[1]{0}', space=sflag, size = 0x4, scoped, tag = 'scoped memory for tpu_custom_call.1']
    #allocation16 [shape = 'u8[4096]{0}', space=vmem, size = 0x1000, scoped, tag = 'output window, operand 2, single buffered']
    #allocation17 [shape = 'u8[4096]{0}', space=vmem, size = 0x1000, scoped, tag = 'output window, operand 3, single buffered']
    #allocation18 [shape = 's32[1]{0}', space=sflag, size = 0x4, scoped, tag = 'scoped memory for tpu_custom_call.1']
    #allocation19 [shape = 'u8[4096]{0}', space=vmem, size = 0x1000, scoped, tag = 'output window, operand 4, single buffered']
    %19 = vsyncpa [#allocation3], 0
    %20 = vsyncpa [#allocation6], 0
    %21 = vsyncpa [#allocation9], 0
    %22 = vsyncpa [#allocation12], 0
    %23 = vsyncpa [#allocation4], 0
    %24 = vsyncpa [#allocation15], 0
    %25 = vsyncpa [#allocation18], 0
    // Predicated region
    $region2: #{tpu_custom_call.1} parent=1 // pred_check
      _
    $region3: #{tpu_custom_call.1} parent=1 // pred_check_branch
      %27 = sbr.rel (0) target = $region5
    $region4: #{tpu_custom_call.1} parent=1 // pred_region
      %29 = vsyncadd [#allocation3], 0
      %s30 = sshll.u32 %s0, 4
      %s31 = int_to_ptr.hbm [resolvable:$true] %s30
      %s32 = sshll.u32 [#allocation2], 4
      %s33 = int_to_ptr.vmem [resolvable:$true] %s32
      %38 = dma.hbm_to_vmem [thread:$0]  %s31, 128, %s33, [#allocation3], 64, 64, 4
    $region5: #{tpu_custom_call.1} parent=1 // pred_fallthru
      _
    // Predicated region
    $region6: #{tpu_custom_call.1} parent=1 // pred_check
      _
    $region7: #{tpu_custom_call.1} parent=1 // pred_check_branch
      %40 = sbr.rel (0) target = $region9
    $region8: #{tpu_custom_call.1} parent=1 // pred_region
      %42 = vsyncadd [#allocation6], 0
      %s43 = sshll.u32 %s1, 4
      %s44 = int_to_ptr.hbm [resolvable:$true] %s43
      %s45 = sshll.u32 [#allocation5], 4
      %s46 = int_to_ptr.vmem [resolvable:$true] %s45
      %51 = dma.hbm_to_vmem [thread:$0]  %s44, 128, %s46, [#allocation6], 64, 64, 4
    $region9: #{tpu_custom_call.1} parent=1 // pred_fallthru
      _
    // Predicated region
    $region10: #{tpu_custom_call.1} parent=1 // pred_check
      _
    $region11: #{tpu_custom_call.1} parent=1 // pred_check_branch
      %53 = sbr.rel (0) target = $region13
    $region12: #{tpu_custom_call.1} parent=1 // pred_region
      %55 = vsyncadd [#allocation6], 0
      %s56 = sshll.u32 %s2, 4
      %s57 = int_to_ptr.hbm [resolvable:$true] %s56
      %s58 = sshll.u32 [#allocation7], 4
      %s59 = int_to_ptr.vmem [resolvable:$true] %s58
      %64 = dma.hbm_to_vmem [thread:$0]  %s57, 256, %s59, [#allocation6], 128, 128, 8
    $region13: #{tpu_custom_call.1} parent=1 // pred_fallthru
      _
    // Predicated region
    $region14: #{tpu_custom_call.1} parent=1 // pred_check
      _
    $region15: #{tpu_custom_call.1} parent=1 // pred_check_branch
      %66 = sbr.rel (0) target = $region17
    $region16: #{tpu_custom_call.1} parent=1 // pred_region
      %68 = vsyncadd [#allocation9], 0
      %s69 = sshll.u32 %s3, 4
      %s70 = int_to_ptr.hbm [resolvable:$true] %s69
      %s71 = sshll.u32 [#allocation8], 4
      %s72 = int_to_ptr.vmem [resolvable:$true] %s71
      %77 = dma.hbm_to_vmem [thread:$0]  %s70, 256, %s72, [#allocation9], 128, 128, 8
    $region17: #{tpu_custom_call.1} parent=1 // pred_fallthru
      _
    // Predicated region
    $region18: #{tpu_custom_call.1} parent=1 // pred_check
      _
    $region19: #{tpu_custom_call.1} parent=1 // pred_check_branch
      %79 = sbr.rel (0) target = $region21
    $region20: #{tpu_custom_call.1} parent=1 // pred_region
      %81 = vsyncadd [#allocation9], 0
      %s82 = sshll.u32 %s4, 4
      %s83 = int_to_ptr.hbm [resolvable:$true] %s82
      %s84 = sshll.u32 [#allocation10], 4
      %s85 = int_to_ptr.vmem [resolvable:$true] %s84
      %90 = dma.hbm_to_vmem [thread:$0]  %s83, 5120, %s85, [#allocation9], 320, 320, 20
    $region21: #{tpu_custom_call.1} parent=1 // pred_fallthru
      _
    // Predicated region
    $region22: #{tpu_custom_call.1} parent=1 // pred_check
      _
    $region23: #{tpu_custom_call.1} parent=1 // pred_check_branch
      %92 = sbr.rel (0) target = $region25
    $region24: #{tpu_custom_call.1} parent=1 // pred_region
      %94 = vsyncadd [#allocation12], 0
      %s95 = sshll.u32 %s5, 4
      %s96 = int_to_ptr.hbm [resolvable:$true] %s95
      %s97 = sshll.u32 [#allocation11], 4
      %s98 = int_to_ptr.vmem [resolvable:$true] %s97
      %103 = dma.hbm_to_vmem [thread:$0]  %s96, 5120, %s98, [#allocation12], 320, 320, 20
    $region25: #{tpu_custom_call.1} parent=1 // pred_fallthru
      _
    // Predicated region
    $region26: #{tpu_custom_call.1} parent=1 // pred_check
      _
    $region27: #{tpu_custom_call.1} parent=1 // pred_check_branch
      %105 = sbr.rel (0) target = $region29
    $region28: #{tpu_custom_call.1} parent=1 // pred_region
      _
    $region29: #{tpu_custom_call.1} parent=1 // pred_fallthru
      _
    // Predicated region
    $region30: #{tpu_custom_call.1} parent=1 // pred_check
      _
    $region31: #{tpu_custom_call.1} parent=1 // pred_check_branch
      %107 = sbr.rel (0) target = $region33
    $region32: #{tpu_custom_call.1} parent=1 // pred_region
      _
    $region33: #{tpu_custom_call.1} parent=1 // pred_fallthru
      _
    // Predicated region
    $region34: #{tpu_custom_call.1} parent=1 // pred_check
      _
    $region35: #{tpu_custom_call.1} parent=1 // pred_check_branch
      %109 = sbr.rel (0) target = $region37
    $region36: #{tpu_custom_call.1} parent=1 // pred_region
      _
    $region37: #{tpu_custom_call.1} parent=1 // pred_fallthru
      _
    // Predicated region
    $region38: #{tpu_custom_call.1} parent=1 // pred_check
      _
    $region39: #{tpu_custom_call.1} parent=1 // pred_check_branch
      %111 = sbr.rel (0) target = $region41
    $region40: #{tpu_custom_call.1} parent=1 // pred_region
      %113 = dma.done [#allocation3], 128
    $region41: #{tpu_custom_call.1} parent=1 // pred_fallthru
      _
    // Predicated region
    $region42: #{tpu_custom_call.1} parent=1 // pred_check
      _
    $region43: #{tpu_custom_call.1} parent=1 // pred_check_branch
      %115 = sbr.rel (0) target = $region45
    $region44: #{tpu_custom_call.1} parent=1 // pred_region
      %117 = dma.done [#allocation6], 128
    $region45: #{tpu_custom_call.1} parent=1 // pred_fallthru
      _
    // Predicated region
    $region46: #{tpu_custom_call.1} parent=1 // pred_check
      _
    $region47: #{tpu_custom_call.1} parent=1 // pred_check_branch
      %119 = sbr.rel (0) target = $region49
    $region48: #{tpu_custom_call.1} parent=1 // pred_region
      %121 = dma.done [#allocation6], 256
    $region49: #{tpu_custom_call.1} parent=1 // pred_fallthru
      _
    // Predicated region
    $region50: #{tpu_custom_call.1} parent=1 // pred_check
      _
    $region51: #{tpu_custom_call.1} parent=1 // pred_check_branch
      %123 = sbr.rel (0) target = $region53
    $region52: #{tpu_custom_call.1} parent=1 // pred_region
      %125 = dma.done [#allocation9], 256
    $region53: #{tpu_custom_call.1} parent=1 // pred_fallthru
      _
    // Predicated region
    $region54: #{tpu_custom_call.1} parent=1 // pred_check
      _
    $region55: #{tpu_custom_call.1} parent=1 // pred_check_branch
      %127 = sbr.rel (0) target = $region57
    $region56: #{tpu_custom_call.1} parent=1 // pred_region
      %129 = dma.done [#allocation9], 5120
    $region57: #{tpu_custom_call.1} parent=1 // pred_fallthru
      _
    // Predicated region
    $region58: #{tpu_custom_call.1} parent=1 // pred_check
      _
    $region59: #{tpu_custom_call.1} parent=1 // pred_check_branch
      %131 = sbr.rel (0) target = $region61
    $region60: #{tpu_custom_call.1} parent=1 // pred_region
      %133 = dma.done [#allocation12], 5120
    $region61: #{tpu_custom_call.1} parent=1 // pred_fallthru
      _
    %v135 = vld [vmem:[#allocation2] sm:$0xf]
    %v136 = vld [vmem:[#allocation2 + $0x4] sm:$0xf]
    %v137 = vld [vmem:[#allocation10] sm:$0xff]
    %v138 = vld [vmem:[#allocation10 + $0x8] sm:$0xff]
    %v139 = vld [vmem:[#allocation10 + $0x10] sm:$0xf]
    %v140 = vld [vmem:[#allocation10 + $0x14] sm:$0xff]
    %v141 = vld [vmem:[#allocation10 + $0x1c] sm:$0xff]
    %v142 = vld [vmem:[#allocation10 + $0x24] sm:$0xf]
    %v143 = vld [vmem:[#allocation10 + $0x28] sm:$0xff]
    %v144 = vld [vmem:[#allocation10 + $0x30] sm:$0xff]
    %v145 = vld [vmem:[#allocation10 + $0x38] sm:$0xf]
    %v146 = vld [vmem:[#allocation10 + $0x3c] sm:$0xff]
    %v147 = vld [vmem:[#allocation10 + $0x44] sm:$0xff]
    %v148 = vld [vmem:[#allocation10 + $0x4c] sm:$0xf]
    %v149 = vld [vmem:[#allocation10 + $0x50] sm:$0xff]
    %v150 = vld [vmem:[#allocation10 + $0x58] sm:$0xff]
    %v151 = vld [vmem:[#allocation10 + $0x60] sm:$0xf]
    %v152 = vld [vmem:[#allocation10 + $0x64] sm:$0xff]
    %v153 = vld [vmem:[#allocation10 + $0x6c] sm:$0xff]
    %v154 = vld [vmem:[#allocation10 + $0x74] sm:$0xf]
    %v155 = vld [vmem:[#allocation10 + $0x78] sm:$0xff]
    %v156 = vld [vmem:[#allocation10 + $0x80] sm:$0xff]
    %v157 = vld [vmem:[#allocation10 + $0x88] sm:$0xf]
    %v158 = vld [vmem:[#allocation10 + $0x8c] sm:$0xff]
    %v159 = vld [vmem:[#allocation10 + $0x94] sm:$0xff]
    %v160 = vld [vmem:[#allocation10 + $0x9c] sm:$0xf]
    %v161 = vld [vmem:[#allocation10 + $0xa0] sm:$0xff]
    %v162 = vld [vmem:[#allocation10 + $0xa8] sm:$0xff]
    %v163 = vld [vmem:[#allocation10 + $0xb0] sm:$0xf]
    %v164 = vld [vmem:[#allocation10 + $0xb4] sm:$0xff]
    %v165 = vld [vmem:[#allocation10 + $0xbc] sm:$0xff]
    %v166 = vld [vmem:[#allocation10 + $0xc4] sm:$0xf]
    %v167 = vld [vmem:[#allocation10 + $0xc8] sm:$0xff]
    %v168 = vld [vmem:[#allocation10 + $0xd0] sm:$0xff]
    %v169 = vld [vmem:[#allocation10 + $0xd8] sm:$0xf]
    %v170 = vld [vmem:[#allocation10 + $0xdc] sm:$0xff]
    %v171 = vld [vmem:[#allocation10 + $0xe4] sm:$0xff]
    %v172 = vld [vmem:[#allocation10 + $0xec] sm:$0xf]
    %v173 = vld [vmem:[#allocation10 + $0xf0] sm:$0xff]
    %v174 = vld [vmem:[#allocation10 + $0xf8] sm:$0xff]
    %v175 = vld [vmem:[#allocation10 + $0x100] sm:$0xf]
    %v176 = vld [vmem:[#allocation10 + $0x104] sm:$0xff]
    %v177 = vld [vmem:[#allocation10 + $0x10c] sm:$0xff]
    %v178 = vld [vmem:[#allocation10 + $0x114] sm:$0xf]
    %v179 = vld [vmem:[#allocation10 + $0x118] sm:$0xff]
    %v180 = vld [vmem:[#allocation10 + $0x120] sm:$0xff]
    %v181 = vld [vmem:[#allocation10 + $0x128] sm:$0xf]
    %v182 = vld [vmem:[#allocation10 + $0x12c] sm:$0xff]
    %v183 = vld [vmem:[#allocation10 + $0x134] sm:$0xff]
    %v184 = vld [vmem:[#allocation10 + $0x13c] sm:$0xf]
    %v185 = vld [vmem:[#allocation5] sm:$0xf]
    %v186 = vld [vmem:[#allocation5 + $0x4] sm:$0xf]
    %v187 = vld [vmem:[#allocation11] sm:$0xff]
    %v188 = vld [vmem:[#allocation11 + $0x8] sm:$0xff]
    %v189 = vld [vmem:[#allocation11 + $0x10] sm:$0xf]
    %v190 = vld [vmem:[#allocation11 + $0x14] sm:$0xff]
    %v191 = vld [vmem:[#allocation11 + $0x1c] sm:$0xff]
    %v192 = vld [vmem:[#allocation11 + $0x24] sm:$0xf]
    %v193 = vld [vmem:[#allocation11 + $0x28] sm:$0xff]
    %v194 = vld [vmem:[#allocation11 + $0x30] sm:$0xff]
    %v195 = vld [vmem:[#allocation11 + $0x38] sm:$0xf]
    %v196 = vld [vmem:[#allocation11 + $0x3c] sm:$0xff]
    %v197 = vld [vmem:[#allocation11 + $0x44] sm:$0xff]
    %v198 = vld [vmem:[#allocation11 + $0x4c] sm:$0xf]
    %v199 = vld [vmem:[#allocation11 + $0x50] sm:$0xff]
    %v200 = vld [vmem:[#allocation11 + $0x58] sm:$0xff]
    %v201 = vld [vmem:[#allocation11 + $0x60] sm:$0xf]
    %v202 = vld [vmem:[#allocation11 + $0x64] sm:$0xff]
    %v203 = vld [vmem:[#allocation11 + $0x6c] sm:$0xff]
    %v204 = vld [vmem:[#allocation11 + $0x74] sm:$0xf]
    %v205 = vld [vmem:[#allocation11 + $0x78] sm:$0xff]
    %v206 = vld [vmem:[#allocation11 + $0x80] sm:$0xff]
    %v207 = vld [vmem:[#allocation11 + $0x88] sm:$0xf]
    %v208 = vld [vmem:[#allocation11 + $0x8c] sm:$0xff]
    %v209 = vld [vmem:[#allocation11 + $0x94] sm:$0xff]
    %v210 = vld [vmem:[#allocation11 + $0x9c] sm:$0xf]
    %v211 = vld [vmem:[#allocation11 + $0xa0] sm:$0xff]
    %v212 = vld [vmem:[#allocation11 + $0xa8] sm:$0xff]
    %v213 = vld [vmem:[#allocation11 + $0xb0] sm:$0xf]
    %v214 = vld [vmem:[#allocation11 + $0xb4] sm:$0xff]
    %v215 = vld [vmem:[#allocation11 + $0xbc] sm:$0xff]
    %v216 = vld [vmem:[#allocation11 + $0xc4] sm:$0xf]
    %v217 = vld [vmem:[#allocation11 + $0xc8] sm:$0xff]
    %v218 = vld [vmem:[#allocation11 + $0xd0] sm:$0xff]
    %v219 = vld [vmem:[#allocation11 + $0xd8] sm:$0xf]
    %v220 = vld [vmem:[#allocation11 + $0xdc] sm:$0xff]
    %v221 = vld [vmem:[#allocation11 + $0xe4] sm:$0xff]
    %v222 = vld [vmem:[#allocation11 + $0xec] sm:$0xf]
    %v223 = vld [vmem:[#allocation11 + $0xf0] sm:$0xff]
    %v224 = vld [vmem:[#allocation11 + $0xf8] sm:$0xff]
    %v225 = vld [vmem:[#allocation11 + $0x100] sm:$0xf]
    %v226 = vld [vmem:[#allocation11 + $0x104] sm:$0xff]
    %v227 = vld [vmem:[#allocation11 + $0x10c] sm:$0xff]
    %v228 = vld [vmem:[#allocation11 + $0x114] sm:$0xf]
    %v229 = vld [vmem:[#allocation11 + $0x118] sm:$0xff]
    %v230 = vld [vmem:[#allocation11 + $0x120] sm:$0xff]
    %v231 = vld [vmem:[#allocation11 + $0x128] sm:$0xf]
    %v232 = vld [vmem:[#allocation11 + $0x12c] sm:$0xff]
    %v233 = vld [vmem:[#allocation11 + $0x134] sm:$0xff]
    %v234 = vld [vmem:[#allocation11 + $0x13c] sm:$0xf]
    %v237 = vunpack.c.l.b16 %v185
    %v238 = vunpack.c.l.b16 %v186
    %v239 = vpack.c.b16 %v238, %v237
    %v289 = vunpack.c.l.b16 %v187
    %v290 = vunpack.c.h.b16 %v187
    %v291 = vunpack.c.l.b16 %v188
    %v292 = vunpack.c.h.b16 %v188
    %v293 = vunpack.c.l.b16 %v189
    %v294 = vunpack.c.l.b16 %v190
    %v295 = vunpack.c.h.b16 %v190
    %v296 = vunpack.c.l.b16 %v191
    %v297 = vunpack.c.h.b16 %v191
    %v298 = vunpack.c.l.b16 %v192
    %v299 = vunpack.c.l.b16 %v193
    %v300 = vunpack.c.h.b16 %v193
    %v301 = vunpack.c.l.b16 %v194
    %v302 = vunpack.c.h.b16 %v194
    %v303 = vunpack.c.l.b16 %v195
    %v304 = vunpack.c.l.b16 %v196
    %v305 = vunpack.c.h.b16 %v196
    %v306 = vunpack.c.l.b16 %v197
    %v307 = vunpack.c.h.b16 %v197
    %v308 = vunpack.c.l.b16 %v198
    %v309 = vunpack.c.l.b16 %v199
    %v310 = vunpack.c.h.b16 %v199
    %v311 = vunpack.c.l.b16 %v200
    %v312 = vunpack.c.h.b16 %v200
    %v313 = vunpack.c.l.b16 %v201
    %v314 = vunpack.c.l.b16 %v202
    %v315 = vunpack.c.h.b16 %v202
    %v316 = vunpack.c.l.b16 %v203
    %v317 = vunpack.c.h.b16 %v203
    %v318 = vunpack.c.l.b16 %v204
    %v319 = vunpack.c.l.b16 %v205
    %v320 = vunpack.c.h.b16 %v205
    %v321 = vunpack.c.l.b16 %v206
    %v322 = vunpack.c.h.b16 %v206
    %v323 = vunpack.c.l.b16 %v207
    %v324 = vunpack.c.l.b16 %v208
    %v325 = vunpack.c.h.b16 %v208
    %v326 = vunpack.c.l.b16 %v209
    %v327 = vunpack.c.h.b16 %v209
    %v328 = vunpack.c.l.b16 %v210
    %v329 = vunpack.c.l.b16 %v211
    %v330 = vunpack.c.h.b16 %v211
    %v331 = vunpack.c.l.b16 %v212
    %v332 = vunpack.c.h.b16 %v212
    %v333 = vunpack.c.l.b16 %v213
    %v334 = vunpack.c.l.b16 %v214
    %v335 = vunpack.c.h.b16 %v214
    %v336 = vunpack.c.l.b16 %v215
    %v337 = vunpack.c.h.b16 %v215
    %v338 = vunpack.c.l.b16 %v216
    %v339 = vunpack.c.l.b16 %v217
    %v340 = vunpack.c.h.b16 %v217
    %v341 = vunpack.c.l.b16 %v218
    %v342 = vunpack.c.h.b16 %v218
    %v343 = vunpack.c.l.b16 %v219
    %v344 = vunpack.c.l.b16 %v220
    %v345 = vunpack.c.h.b16 %v220
    %v346 = vunpack.c.l.b16 %v221
    %v347 = vunpack.c.h.b16 %v221
    %v348 = vunpack.c.l.b16 %v222
    %v349 = vunpack.c.l.b16 %v223
    %v350 = vunpack.c.h.b16 %v223
    %v351 = vunpack.c.l.b16 %v224
    %v352 = vunpack.c.h.b16 %v224
    %v353 = vunpack.c.l.b16 %v225
    %v354 = vunpack.c.l.b16 %v226
    %v355 = vunpack.c.h.b16 %v226
    %v356 = vunpack.c.l.b16 %v227
    %v357 = vunpack.c.h.b16 %v227
    %v358 = vunpack.c.l.b16 %v228
    %v359 = vunpack.c.l.b16 %v229
    %v360 = vunpack.c.h.b16 %v229
    %v361 = vunpack.c.l.b16 %v230
    %v362 = vunpack.c.h.b16 %v230
    %v363 = vunpack.c.l.b16 %v231
    %v364 = vunpack.c.l.b16 %v232
    %v365 = vunpack.c.h.b16 %v232
    %v366 = vunpack.c.l.b16 %v233
    %v367 = vunpack.c.h.b16 %v233
    %v368 = vunpack.c.l.b16 %v234
    %v369 = vpack.c.b16 %v294, %v289
    %v370 = vpack.c.b16 %v295, %v290
    %v371 = vpack.c.b16 %v296, %v291
    %v372 = vpack.c.b16 %v297, %v292
    %v373 = vpack.c.b16 %v298, %v293
    %v374 = vpack.c.b16 %v304, %v299
    %v375 = vpack.c.b16 %v305, %v300
    %v376 = vpack.c.b16 %v306, %v301
    %v377 = vpack.c.b16 %v307, %v302
    %v378 = vpack.c.b16 %v308, %v303
    %v379 = vpack.c.b16 %v314, %v309
    %v380 = vpack.c.b16 %v315, %v310
    %v381 = vpack.c.b16 %v316, %v311
    %v382 = vpack.c.b16 %v317, %v312
    %v383 = vpack.c.b16 %v318, %v313
    %v384 = vpack.c.b16 %v324, %v319
    %v385 = vpack.c.b16 %v325, %v320
    %v386 = vpack.c.b16 %v326, %v321
    %v387 = vpack.c.b16 %v327, %v322
    %v388 = vpack.c.b16 %v328, %v323
    %v389 = vpack.c.b16 %v334, %v329
    %v390 = vpack.c.b16 %v335, %v330
    %v391 = vpack.c.b16 %v336, %v331
    %v392 = vpack.c.b16 %v337, %v332
    %v393 = vpack.c.b16 %v338, %v333
    %v394 = vpack.c.b16 %v344, %v339
    %v395 = vpack.c.b16 %v345, %v340
    %v396 = vpack.c.b16 %v346, %v341
    %v397 = vpack.c.b16 %v347, %v342
    %v398 = vpack.c.b16 %v348, %v343
    %v399 = vpack.c.b16 %v354, %v349
    %v400 = vpack.c.b16 %v355, %v350
    %v401 = vpack.c.b16 %v356, %v351
    %v402 = vpack.c.b16 %v357, %v352
    %v403 = vpack.c.b16 %v358, %v353
    %v404 = vpack.c.b16 %v364, %v359
    %v405 = vpack.c.b16 %v365, %v360
    %v406 = vpack.c.b16 %v366, %v361
    %v407 = vpack.c.b16 %v367, %v362
    %v408 = vpack.c.b16 %v368, %v363
    %449 = vmatpush.bf16.msra.mxu0 %v404
    %450 = vmatpush.bf16.msra.mxu0 %v399
    %451 = vmatpush.bf16.msra.mxu0 %v394
    %452 = vmatpush.bf16.msra.mxu0 %v389
    %453 = vmatpush.bf16.msra.mxu0 %v384
    %454 = vmatpush.bf16.msra.mxu0 %v379
    %455 = vmatpush.bf16.msra.mxu0 %v374
    %456 = vmatpush.bf16.msra.mxu0 %v369
    %457 = vmatmul.bf16.gmra.mxu0 %v239
    %v458 = vpop.f32.mrf.mxu0
    %v459 = vadd.f32 0.0, %v458
    %v460 = vpop.f32.mrf.mxu0
    %v461 = vadd.f32 0.0, %v460
    %462 = vdwg.mxu0
    %463 = vmatpush.bf16.msra.mxu0 %v405
    %464 = vmatpush.bf16.msra.mxu0 %v400
    %465 = vmatpush.bf16.msra.mxu0 %v395
    %466 = vmatpush.bf16.msra.mxu0 %v390
    %467 = vmatpush.bf16.msra.mxu0 %v385
    %468 = vmatpush.bf16.msra.mxu0 %v380
    %469 = vmatpush.bf16.msra.mxu0 %v375
    %470 = vmatpush.bf16.msra.mxu0 %v370
    %471 = vmatmul.bf16.gmra.mxu0 %v239
    %v472 = vpop.f32.mrf.mxu0
    %v473 = vadd.f32 0.0, %v472
    %v474 = vpop.f32.mrf.mxu0
    %v475 = vadd.f32 0.0, %v474
    %476 = vdwg.mxu0
    %477 = vmatpush.bf16.msra.mxu0 %v406
    %478 = vmatpush.bf16.msra.mxu0 %v401
    %479 = vmatpush.bf16.msra.mxu0 %v396
    %480 = vmatpush.bf16.msra.mxu0 %v391
    %481 = vmatpush.bf16.msra.mxu0 %v386
    %482 = vmatpush.bf16.msra.mxu0 %v381
    %483 = vmatpush.bf16.msra.mxu0 %v376
    %484 = vmatpush.bf16.msra.mxu0 %v371
    %485 = vmatmul.bf16.gmra.mxu0 %v239
    %v486 = vpop.f32.mrf.mxu0
    %v487 = vadd.f32 0.0, %v486
    %v488 = vpop.f32.mrf.mxu0
    %v489 = vadd.f32 0.0, %v488
    %490 = vdwg.mxu0
    %491 = vmatpush.bf16.msra.mxu0 %v407
    %492 = vmatpush.bf16.msra.mxu0 %v402
    %493 = vmatpush.bf16.msra.mxu0 %v397
    %494 = vmatpush.bf16.msra.mxu0 %v392
    %495 = vmatpush.bf16.msra.mxu0 %v387
    %496 = vmatpush.bf16.msra.mxu0 %v382
    %497 = vmatpush.bf16.msra.mxu0 %v377
    %498 = vmatpush.bf16.msra.mxu0 %v372
    %499 = vmatmul.bf16.gmra.mxu0 %v239
    %v500 = vpop.f32.mrf.mxu0
    %v501 = vadd.f32 0.0, %v500
    %v502 = vpop.f32.mrf.mxu0
    %v503 = vadd.f32 0.0, %v502
    %504 = vdwg.mxu0
    %505 = vmatpush.bf16.msra.mxu0 %v408
    %506 = vmatpush.bf16.msra.mxu0 %v403
    %507 = vmatpush.bf16.msra.mxu0 %v398
    %508 = vmatpush.bf16.msra.mxu0 %v393
    %509 = vmatpush.bf16.msra.mxu0 %v388
    %510 = vmatpush.bf16.msra.mxu0 %v383
    %511 = vmatpush.bf16.msra.mxu0 %v378
    %512 = vmatpush.bf16.msra.mxu0 %v373
    %513 = vmatmul.bf16.gmra.mxu0 %v239
    %v514 = vpop.f32.mrf.mxu0
    %v515 = vadd.f32 0.0, %v514
    %v516 = vpop.f32.mrf.mxu0
    %v517 = vadd.f32 0.0, %v516
    %518 = vdwg.mxu0
    %v521 = vunpack.c.l.b16 %v135
    %v522 = vunpack.c.l.b16 %v136
    %v523 = vpack.c.b16 %v522, %v521
    %v573 = vunpack.c.l.b16 %v137
    %v574 = vunpack.c.h.b16 %v137
    %v575 = vunpack.c.l.b16 %v138
    %v576 = vunpack.c.h.b16 %v138
    %v577 = vunpack.c.l.b16 %v139
    %v578 = vunpack.c.l.b16 %v140
    %v579 = vunpack.c.h.b16 %v140
    %v580 = vunpack.c.l.b16 %v141
    %v581 = vunpack.c.h.b16 %v141
    %v582 = vunpack.c.l.b16 %v142
    %v583 = vunpack.c.l.b16 %v143
    %v584 = vunpack.c.h.b16 %v143
    %v585 = vunpack.c.l.b16 %v144
    %v586 = vunpack.c.h.b16 %v144
    %v587 = vunpack.c.l.b16 %v145
    %v588 = vunpack.c.l.b16 %v146
    %v589 = vunpack.c.h.b16 %v146
    %v590 = vunpack.c.l.b16 %v147
    %v591 = vunpack.c.h.b16 %v147
    %v592 = vunpack.c.l.b16 %v148
    %v593 = vunpack.c.l.b16 %v149
    %v594 = vunpack.c.h.b16 %v149
    %v595 = vunpack.c.l.b16 %v150
    %v596 = vunpack.c.h.b16 %v150
    %v597 = vunpack.c.l.b16 %v151
    %v598 = vunpack.c.l.b16 %v152
    %v599 = vunpack.c.h.b16 %v152
    %v600 = vunpack.c.l.b16 %v153
    %v601 = vunpack.c.h.b16 %v153
    %v602 = vunpack.c.l.b16 %v154
    %v603 = vunpack.c.l.b16 %v155
    %v604 = vunpack.c.h.b16 %v155
    %v605 = vunpack.c.l.b16 %v156
    %v606 = vunpack.c.h.b16 %v156
    %v607 = vunpack.c.l.b16 %v157
    %v608 = vunpack.c.l.b16 %v158
    %v609 = vunpack.c.h.b16 %v158
    %v610 = vunpack.c.l.b16 %v159
    %v611 = vunpack.c.h.b16 %v159
    %v612 = vunpack.c.l.b16 %v160
    %v613 = vunpack.c.l.b16 %v161
    %v614 = vunpack.c.h.b16 %v161
    %v615 = vunpack.c.l.b16 %v162
    %v616 = vunpack.c.h.b16 %v162
    %v617 = vunpack.c.l.b16 %v163
    %v618 = vunpack.c.l.b16 %v164
    %v619 = vunpack.c.h.b16 %v164
    %v620 = vunpack.c.l.b16 %v165
    %v621 = vunpack.c.h.b16 %v165
    %v622 = vunpack.c.l.b16 %v166
    %v623 = vunpack.c.l.b16 %v167
    %v624 = vunpack.c.h.b16 %v167
    %v625 = vunpack.c.l.b16 %v168
    %v626 = vunpack.c.h.b16 %v168
    %v627 = vunpack.c.l.b16 %v169
    %v628 = vunpack.c.l.b16 %v170
    %v629 = vunpack.c.h.b16 %v170
    %v630 = vunpack.c.l.b16 %v171
    %v631 = vunpack.c.h.b16 %v171
    %v632 = vunpack.c.l.b16 %v172
    %v633 = vunpack.c.l.b16 %v173
    %v634 = vunpack.c.h.b16 %v173
    %v635 = vunpack.c.l.b16 %v174
    %v636 = vunpack.c.h.b16 %v174
    %v637 = vunpack.c.l.b16 %v175
    %v638 = vunpack.c.l.b16 %v176
    %v639 = vunpack.c.h.b16 %v176
    %v640 = vunpack.c.l.b16 %v177
    %v641 = vunpack.c.h.b16 %v177
    %v642 = vunpack.c.l.b16 %v178
    %v643 = vunpack.c.l.b16 %v179
    %v644 = vunpack.c.h.b16 %v179
    %v645 = vunpack.c.l.b16 %v180
    %v646 = vunpack.c.h.b16 %v180
    %v647 = vunpack.c.l.b16 %v181
    %v648 = vunpack.c.l.b16 %v182
    %v649 = vunpack.c.h.b16 %v182
    %v650 = vunpack.c.l.b16 %v183
    %v651 = vunpack.c.h.b16 %v183
    %v652 = vunpack.c.l.b16 %v184
    %v653 = vpack.c.b16 %v578, %v573
    %v654 = vpack.c.b16 %v579, %v574
    %v655 = vpack.c.b16 %v580, %v575
    %v656 = vpack.c.b16 %v581, %v576
    %v657 = vpack.c.b16 %v582, %v577
    %v658 = vpack.c.b16 %v588, %v583
    %v659 = vpack.c.b16 %v589, %v584
    %v660 = vpack.c.b16 %v590, %v585
    %v661 = vpack.c.b16 %v591, %v586
    %v662 = vpack.c.b16 %v592, %v587
    %v663 = vpack.c.b16 %v598, %v593
    %v664 = vpack.c.b16 %v599, %v594
    %v665 = vpack.c.b16 %v600, %v595
    %v666 = vpack.c.b16 %v601, %v596
    %v667 = vpack.c.b16 %v602, %v597
    %v668 = vpack.c.b16 %v608, %v603
    %v669 = vpack.c.b16 %v609, %v604
    %v670 = vpack.c.b16 %v610, %v605
    %v671 = vpack.c.b16 %v611, %v606
    %v672 = vpack.c.b16 %v612, %v607
    %v673 = vpack.c.b16 %v618, %v613
    %v674 = vpack.c.b16 %v619, %v614
    %v675 = vpack.c.b16 %v620, %v615
    %v676 = vpack.c.b16 %v621, %v616
    %v677 = vpack.c.b16 %v622, %v617
    %v678 = vpack.c.b16 %v628, %v623
    %v679 = vpack.c.b16 %v629, %v624
    %v680 = vpack.c.b16 %v630, %v625
    %v681 = vpack.c.b16 %v631, %v626
    %v682 = vpack.c.b16 %v632, %v627
    %v683 = vpack.c.b16 %v638, %v633
    %v684 = vpack.c.b16 %v639, %v634
    %v685 = vpack.c.b16 %v640, %v635
    %v686 = vpack.c.b16 %v641, %v636
    %v687 = vpack.c.b16 %v642, %v637
    %v688 = vpack.c.b16 %v648, %v643
    %v689 = vpack.c.b16 %v649, %v644
    %v690 = vpack.c.b16 %v650, %v645
    %v691 = vpack.c.b16 %v651, %v646
    %v692 = vpack.c.b16 %v652, %v647
    %733 = vmatpush.bf16.msra.mxu0 %v688
    %734 = vmatpush.bf16.msra.mxu0 %v683
    %735 = vmatpush.bf16.msra.mxu0 %v678
    %736 = vmatpush.bf16.msra.mxu0 %v673
    %737 = vmatpush.bf16.msra.mxu0 %v668
    %738 = vmatpush.bf16.msra.mxu0 %v663
    %739 = vmatpush.bf16.msra.mxu0 %v658
    %740 = vmatpush.bf16.msra.mxu0 %v653
    %741 = vmatmul.bf16.gmra.mxu0 %v523
    %v742 = vpop.f32.mrf.mxu0
    %v743 = vadd.f32 %v459, %v742
    %v744 = vpop.f32.mrf.mxu0
    %v745 = vadd.f32 %v461, %v744
    %746 = vdwg.mxu0
    %747 = vmatpush.bf16.msra.mxu0 %v689
    %748 = vmatpush.bf16.msra.mxu0 %v684
    %749 = vmatpush.bf16.msra.mxu0 %v679
    %750 = vmatpush.bf16.msra.mxu0 %v674
    %751 = vmatpush.bf16.msra.mxu0 %v669
    %752 = vmatpush.bf16.msra.mxu0 %v664
    %753 = vmatpush.bf16.msra.mxu0 %v659
    %754 = vmatpush.bf16.msra.mxu0 %v654
    %755 = vmatmul.bf16.gmra.mxu0 %v523
    %v756 = vpop.f32.mrf.mxu0
    %v757 = vadd.f32 %v473, %v756
    %v758 = vpop.f32.mrf.mxu0
    %v759 = vadd.f32 %v475, %v758
    %760 = vdwg.mxu0
    %761 = vmatpush.bf16.msra.mxu0 %v690
    %762 = vmatpush.bf16.msra.mxu0 %v685
    %763 = vmatpush.bf16.msra.mxu0 %v680
    %764 = vmatpush.bf16.msra.mxu0 %v675
    %765 = vmatpush.bf16.msra.mxu0 %v670
    %766 = vmatpush.bf16.msra.mxu0 %v665
    %767 = vmatpush.bf16.msra.mxu0 %v660
    %768 = vmatpush.bf16.msra.mxu0 %v655
    %769 = vmatmul.bf16.gmra.mxu0 %v523
    %v770 = vpop.f32.mrf.mxu0
    %v771 = vadd.f32 %v487, %v770
    %v772 = vpop.f32.mrf.mxu0
    %v773 = vadd.f32 %v489, %v772
    %774 = vdwg.mxu0
    %775 = vmatpush.bf16.msra.mxu0 %v691
    %776 = vmatpush.bf16.msra.mxu0 %v686
    %777 = vmatpush.bf16.msra.mxu0 %v681
    %778 = vmatpush.bf16.msra.mxu0 %v676
    %779 = vmatpush.bf16.msra.mxu0 %v671
    %780 = vmatpush.bf16.msra.mxu0 %v666
    %781 = vmatpush.bf16.msra.mxu0 %v661
    %782 = vmatpush.bf16.msra.mxu0 %v656
    %783 = vmatmul.bf16.gmra.mxu0 %v523
    %v784 = vpop.f32.mrf.mxu0
    %v785 = vadd.f32 %v501, %v784
    %v786 = vpop.f32.mrf.mxu0
    %v787 = vadd.f32 %v503, %v786
    %788 = vdwg.mxu0
    %789 = vmatpush.bf16.msra.mxu0 %v692
    %790 = vmatpush.bf16.msra.mxu0 %v687
    %791 = vmatpush.bf16.msra.mxu0 %v682
    %792 = vmatpush.bf16.msra.mxu0 %v677
    %793 = vmatpush.bf16.msra.mxu0 %v672
    %794 = vmatpush.bf16.msra.mxu0 %v667
    %795 = vmatpush.bf16.msra.mxu0 %v662
    %796 = vmatpush.bf16.msra.mxu0 %v657
    %797 = vmatmul.bf16.gmra.mxu0 %v523
    %v798 = vpop.f32.mrf.mxu0
    %v799 = vadd.f32 %v515, %v798
    %v800 = vpop.f32.mrf.mxu0
    %v801 = vadd.f32 %v517, %v800
    %802 = vdwg.mxu0
    %v803 = vld [vmem:[%s6] sm:$0x1f]
    %v805 = vperm.slane %v803, 0
    %v806 = vperm.slane %v803, 1
    %v807 = vperm.slane %v803, 2
    %v808 = vperm.slane %v803, 3
    %v809 = vperm.slane %v803, 4
    %v815 = vadd.f32 %v743, %v805
    %v816 = vadd.f32 %v757, %v806
    %v817 = vadd.f32 %v771, %v807
    %v818 = vadd.f32 %v785, %v808
    %v819 = vadd.f32 %v799, %v809
    %v820 = vadd.f32 %v745, %v805
    %v821 = vadd.f32 %v759, %v806
    %v822 = vadd.f32 %v773, %v807
    %v823 = vadd.f32 %v787, %v808
    %v824 = vadd.f32 %v801, %v809
    %v825 = vpack.c.bf16 %v816, %v815
    %v826 = vpack.c.bf16 %v818, %v817
    %v827 = vpack.c.bf16 %v819, %v819
    %v828 = vpack.c.bf16 %v821, %v820
    %v829 = vpack.c.bf16 %v823, %v822
    %v830 = vpack.c.bf16 %v824, %v824
    %v833 = vrot.slane %v825, 4
    %v834 = vrot.slane %v828, 4
    %v837 = vxor.u32 %v833, 2147516416
    %v838 = vxor.u32 %v834, 2147516416
    %v839 = vunpack.c.l.bf16 %v837
    %v840 = vunpack.c.l.bf16 %v838
    %v841 = vmul.f32 %v839, 1.442695
    %v842 = vpow.pop %v841
    %v843 = vmul.f32 %v840, 1.442695
    %v844 = vpow.pop %v843
    %v845 = vpack.c.bf16 %v842, %v842
    %v846 = vpack.c.bf16 %v844, %v844
    %v847 = vunpack.c.l.bf16 %v845
    %v848 = vunpack.c.l.bf16 %v846
    %v849 = vadd.f32 %v847, 1.0
    %v850 = vadd.f32 %v848, 1.0
    %v851 = vpack.c.bf16 %v849, %v849
    %v852 = vpack.c.bf16 %v850, %v850
    %v853 = vunpack.c.h.bf16 1065369472
    %v854 = vunpack.c.l.bf16 1065369472
    %v855 = vunpack.c.h.bf16 %v851
    %v856 = vunpack.c.l.bf16 %v851
    %v857 = vrcp.pop %v855
    %v858 = vmul.f32 %v853, %v857
    %v859 = vrcp.pop %v856
    %v860 = vmul.f32 %v854, %v859
    %v861 = vpack.c.bf16 %v858, %v860
    %v862 = vunpack.c.h.bf16 %v852
    %v863 = vunpack.c.l.bf16 %v852
    %v864 = vrcp.pop %v862
    %v865 = vmul.f32 %v853, %v864
    %v866 = vrcp.pop %v863
    %v867 = vmul.f32 %v854, %v866
    %v868 = vpack.c.bf16 %v865, %v867
    %v869 = vxor.u32 %v826, 2147516416
    %v870 = vxor.u32 %v829, 2147516416
    %v871 = vunpack.c.l.bf16 %v869
    %v872 = vunpack.c.l.bf16 %v870
    %v873 = vmul.f32 %v871, 1.442695
    %v874 = vpow.pop %v873
    %v875 = vmul.f32 %v872, 1.442695
    %v876 = vpow.pop %v875
    %v877 = vpack.c.bf16 %v874, %v874
    %v878 = vpack.c.bf16 %v876, %v876
    %v879 = vunpack.c.l.bf16 %v877
    %v880 = vunpack.c.l.bf16 %v878
    %v881 = vadd.f32 %v879, 1.0
    %v882 = vadd.f32 %v880, 1.0
    %v883 = vpack.c.bf16 %v881, %v881
    %v884 = vpack.c.bf16 %v882, %v882
    %v885 = vunpack.c.h.bf16 %v883
    %v886 = vunpack.c.l.bf16 %v883
    %v887 = vrcp.pop %v885
    %v888 = vmul.f32 %v853, %v887
    %v889 = vrcp.pop %v886
    %v890 = vmul.f32 %v854, %v889
    %v891 = vpack.c.bf16 %v888, %v890
    %v892 = vunpack.c.h.bf16 %v884
    %v893 = vunpack.c.l.bf16 %v884
    %v894 = vrcp.pop %v892
    %v895 = vmul.f32 %v853, %v894
    %v896 = vrcp.pop %v893
    %v897 = vmul.f32 %v854, %v896
    %v898 = vpack.c.bf16 %v895, %v897
    %v899 = vxor.u32 %v827, 2147516416
    %v900 = vxor.u32 %v830, 2147516416
    %v901 = vunpack.c.l.bf16 %v899
    %v902 = vunpack.c.l.bf16 %v900
    %v903 = vmul.f32 %v901, 1.442695
    %v904 = vpow.pop %v903
    %v905 = vmul.f32 %v902, 1.442695
    %v906 = vpow.pop %v905
    %v907 = vpack.c.bf16 %v904, %v904
    %v908 = vpack.c.bf16 %v906, %v906
    %v909 = vunpack.c.l.bf16 %v907
    %v910 = vunpack.c.l.bf16 %v908
    %v911 = vadd.f32 %v909, 1.0
    %v912 = vadd.f32 %v910, 1.0
    %v913 = vpack.c.bf16 %v911, %v911
    %v914 = vpack.c.bf16 %v912, %v912
    %v915 = vunpack.c.h.bf16 %v913
    %v916 = vunpack.c.l.bf16 %v913
    %v917 = vrcp.pop %v915
    %v918 = vmul.f32 %v853, %v917
    %v919 = vrcp.pop %v916
    %v920 = vmul.f32 %v854, %v919
    %v921 = vpack.c.bf16 %v918, %v920
    %v922 = vunpack.c.h.bf16 %v914
    %v923 = vunpack.c.l.bf16 %v914
    %v924 = vrcp.pop %v922
    %v925 = vmul.f32 %v853, %v924
    %v926 = vrcp.pop %v923
    %v927 = vmul.f32 %v854, %v926
    %v928 = vpack.c.bf16 %v925, %v927
    %v929 = vxor.u32 %v825, 2147516416
    %v930 = vxor.u32 %v828, 2147516416
    %v931 = vunpack.c.l.bf16 %v929
    %v932 = vunpack.c.l.bf16 %v930
    %v933 = vmul.f32 %v931, 1.442695
    %v934 = vpow.pop %v933
    %v935 = vmul.f32 %v932, 1.442695
    %v936 = vpow.pop %v935
    %v937 = vpack.c.bf16 %v934, %v934
    %v938 = vpack.c.bf16 %v936, %v936
    %v939 = vunpack.c.l.bf16 %v937
    %v940 = vunpack.c.l.bf16 %v938
    %v941 = vadd.f32 %v939, 1.0
    %v942 = vadd.f32 %v940, 1.0
    %v943 = vpack.c.bf16 %v941, %v941
    %v944 = vpack.c.bf16 %v942, %v942
    %v945 = vunpack.c.h.bf16 %v943
    %v946 = vunpack.c.l.bf16 %v943
    %v947 = vrcp.pop %v945
    %v948 = vmul.f32 %v853, %v947
    %v949 = vrcp.pop %v946
    %v950 = vmul.f32 %v854, %v949
    %v951 = vpack.c.bf16 %v948, %v950
    %v952 = vunpack.c.h.bf16 %v944
    %v953 = vunpack.c.l.bf16 %v944
    %v954 = vrcp.pop %v952
    %v955 = vmul.f32 %v853, %v954
    %v956 = vrcp.pop %v953
    %v957 = vmul.f32 %v854, %v956
    %v958 = vpack.c.bf16 %v955, %v957
    %v961 = vrot.slane %v826, 4
    %v962 = vrot.slane %v829, 4
    %v965 = vunpack.c.l.bf16 %v961
    %v966 = vunpack.c.l.bf16 %v962
    %v967 = vtanh.pop %v965
    %v968 = vtanh.pop %v966
    %v969 = vpack.c.bf16 %v967, %v967
    %v970 = vpack.c.bf16 %v968, %v968
    %v971 = vld [vmem:[%s7] sm:$0x1]
    %v972 = vld [vmem:[#allocation8] sm:$0xff]
    %v973 = vld [vmem:[#allocation8 + $0x8] sm:$0xff]
    %v974 = vunpack.c.l.bf16 %v861
    %v975 = vunpack.c.l.bf16 %v868
    %v976 = vmul.f32 %v972, %v974
    %v977 = vmul.f32 %v973, %v975
    %v979 = vperm.slane %v971, 0
    %v981 = vmul.f32 %v979, %v976
    %v982 = vmul.f32 %v979, %v977
    %v983 = vld [vmem:[%s8] sm:$0x1]
    %v984 = vld [vmem:[#allocation7] sm:$0xff]
    %v985 = vld [vmem:[#allocation7 + $0x8] sm:$0xff]
    %v986 = vunpack.c.l.bf16 %v891
    %v987 = vunpack.c.l.bf16 %v898
    %v988 = vmul.f32 %v984, %v986
    %v989 = vmul.f32 %v985, %v987
    %v991 = vperm.slane %v983, 0
    %v993 = vmul.f32 %v991, %v988
    %v994 = vmul.f32 %v991, %v989
    %v995 = vadd.f32 %v981, %v993
    %v996 = vadd.f32 %v982, %v994
    %v997 = vunpack.c.l.bf16 %v969
    %v998 = vunpack.c.l.bf16 %v970
    %v999 = vunpack.c.l.bf16 %v951
    %v1000 = vunpack.c.l.bf16 %v958
    %v1001 = vmul.f32 %v997, %v999
    %v1002 = vmul.f32 %v998, %v1000
    %v1003 = vadd.f32 %v995, %v1001
    %v1004 = vadd.f32 %v996, %v1002
    %v1005 = vpack.c.bf16 %v1003, %v1003
    %v1006 = vpack.c.bf16 %v1004, %v1004
    %v1007 = vunpack.c.l.bf16 %v1005
    %v1008 = vunpack.c.l.bf16 %v1006
    %v1009 = vtanh.pop %v1007
    %v1010 = vtanh.pop %v1008
    %v1011 = vpack.c.bf16 %v1009, %v1009
    %v1012 = vpack.c.bf16 %v1010, %v1010
    %v1013 = vunpack.c.l.bf16 %v921
    %v1014 = vunpack.c.l.bf16 %v928
    %v1015 = vunpack.c.l.bf16 %v1011
    %v1016 = vunpack.c.l.bf16 %v1012
    %v1017 = vmul.f32 %v1013, %v1015
    %v1018 = vmul.f32 %v1014, %v1016
    %v1019 = vpack.c.bf16 %v1017, %v1017
    %v1020 = vpack.c.bf16 %v1018, %v1018
    %1021 = vst [vmem:[#allocation13] sm:$0xf] %v1019
    %1022 = vst [vmem:[#allocation13 + $0x4] sm:$0xf] %v1020
    %1023 = vst [vmem:[#allocation14] sm:$0xff] %v1003
    %1024 = vst [vmem:[#allocation14 + $0x8] sm:$0xff] %v1004
    %1025 = vst [vmem:[#allocation16] sm:$0xf] %v861
    %1026 = vst [vmem:[#allocation16 + $0x4] sm:$0xf] %v868
    %1027 = vst [vmem:[#allocation17] sm:$0xf] %v891
    %1028 = vst [vmem:[#allocation17 + $0x4] sm:$0xf] %v898
    %1029 = vst [vmem:[#allocation19] sm:$0xf] %v921
    %1030 = vst [vmem:[#allocation19 + $0x4] sm:$0xf] %v928
    // Predicated region
    $region62: #{tpu_custom_call.1} parent=1 // pred_check
      _
    $region63: #{tpu_custom_call.1} parent=1 // pred_check_branch
      %1032 = sbr.rel (0) target = $region65
    $region64: #{tpu_custom_call.1} parent=1 // pred_region
      %1034 = vsyncadd [#allocation4], 0
      %s1035 = sshll.u32 [#allocation13], 4
      %s1036 = int_to_ptr.vmem [resolvable:$true] %s1035
      %s1037 = sshll.u32 %s9, 4
      %s1038 = int_to_ptr.hbm [resolvable:$true] %s1037
      %1043 = dma.vmem_to_hbm [thread:$0]  %s1036, 128, %s1038, [#allocation4], 64, 64, 4
    $region65: #{tpu_custom_call.1} parent=1 // pred_fallthru
      _
    // Predicated region
    $region66: #{tpu_custom_call.1} parent=1 // pred_check
      _
    $region67: #{tpu_custom_call.1} parent=1 // pred_check_branch
      %1045 = sbr.rel (0) target = $region69
    $region68: #{tpu_custom_call.1} parent=1 // pred_region
      %1047 = vsyncadd [#allocation15], 0
      %s1048 = sshll.u32 [#allocation14], 4
      %s1049 = int_to_ptr.vmem [resolvable:$true] %s1048
      %s1050 = sshll.u32 %s10, 4
      %s1051 = int_to_ptr.hbm [resolvable:$true] %s1050
      %1056 = dma.vmem_to_hbm [thread:$0]  %s1049, 256, %s1051, [#allocation15], 128, 128, 8
    $region69: #{tpu_custom_call.1} parent=1 // pred_fallthru
      _
    // Predicated region
    $region70: #{tpu_custom_call.1} parent=1 // pred_check
      _
    $region71: #{tpu_custom_call.1} parent=1 // pred_check_branch
      %1058 = sbr.rel (0) target = $region73
    $region72: #{tpu_custom_call.1} parent=1 // pred_region
      %1060 = vsyncadd [#allocation15], 0
      %s1061 = sshll.u32 [#allocation16], 4
      %s1062 = int_to_ptr.vmem [resolvable:$true] %s1061
      %s1063 = sshll.u32 %s11, 4
      %s1064 = int_to_ptr.hbm [resolvable:$true] %s1063
      %1069 = dma.vmem_to_hbm [thread:$0]  %s1062, 128, %s1064, [#allocation15], 64, 64, 4
    $region73: #{tpu_custom_call.1} parent=1 // pred_fallthru
      _
    // Predicated region
    $region74: #{tpu_custom_call.1} parent=1 // pred_check
      _
    $region75: #{tpu_custom_call.1} parent=1 // pred_check_branch
      %1071 = sbr.rel (0) target = $region77
    $region76: #{tpu_custom_call.1} parent=1 // pred_region
      %1073 = vsyncadd [#allocation18], 0
      %s1074 = sshll.u32 [#allocation17], 4
      %s1075 = int_to_ptr.vmem [resolvable:$true] %s1074
      %s1076 = sshll.u32 %s12, 4
      %s1077 = int_to_ptr.hbm [resolvable:$true] %s1076
      %1082 = dma.vmem_to_hbm [thread:$0]  %s1075, 128, %s1077, [#allocation18], 64, 64, 4
    $region77: #{tpu_custom_call.1} parent=1 // pred_fallthru
      _
    // Predicated region
    $region78: #{tpu_custom_call.1} parent=1 // pred_check
      _
    $region79: #{tpu_custom_call.1} parent=1 // pred_check_branch
      %1084 = sbr.rel (0) target = $region81
    $region80: #{tpu_custom_call.1} parent=1 // pred_region
      %1086 = vsyncadd [#allocation18], 0
      %s1087 = sshll.u32 [#allocation19], 4
      %s1088 = int_to_ptr.vmem [resolvable:$true] %s1087
      %s1089 = sshll.u32 %s13, 4
      %s1090 = int_to_ptr.hbm [resolvable:$true] %s1089
      %1095 = dma.vmem_to_hbm [thread:$0]  %s1088, 128, %s1090, [#allocation18], 64, 64, 4
    $region81: #{tpu_custom_call.1} parent=1 // pred_fallthru
      _
    // Predicated region
    $region82: #{tpu_custom_call.1} parent=1 // pred_check
      _
    $region83: #{tpu_custom_call.1} parent=1 // pred_check_branch
      %1097 = sbr.rel (0) target = $region85
    $region84: #{tpu_custom_call.1} parent=1 // pred_region
      %1099 = dma.done [#allocation4], 128
    $region85: #{tpu_custom_call.1} parent=1 // pred_fallthru
      _
    // Predicated region
    $region86: #{tpu_custom_call.1} parent=1 // pred_check
      _
    $region87: #{tpu_custom_call.1} parent=1 // pred_check_branch
      %1101 = sbr.rel (0) target = $region89
    $region88: #{tpu_custom_call.1} parent=1 // pred_region
      %1103 = dma.done [#allocation15], 256
    $region89: #{tpu_custom_call.1} parent=1 // pred_fallthru
      _
    // Predicated region
    $region90: #{tpu_custom_call.1} parent=1 // pred_check
      _
    $region91: #{tpu_custom_call.1} parent=1 // pred_check_branch
      %1105 = sbr.rel (0) target = $region93
    $region92: #{tpu_custom_call.1} parent=1 // pred_region
      %1107 = dma.done [#allocation15], 128
    $region93: #{tpu_custom_call.1} parent=1 // pred_fallthru
      _
    // Predicated region
    $region94: #{tpu_custom_call.1} parent=1 // pred_check
      _
    $region95: #{tpu_custom_call.1} parent=1 // pred_check_branch
      %1109 = sbr.rel (0) target = $region97
    $region96: #{tpu_custom_call.1} parent=1 // pred_region
      %1111 = dma.done [#allocation18], 128
    $region97: #{tpu_custom_call.1} parent=1 // pred_fallthru
      _
    // Predicated region
    $region98: #{tpu_custom_call.1} parent=1 // pred_check
      _
    $region99: #{tpu_custom_call.1} parent=1 // pred_check_branch
      %1113 = sbr.rel (0) target = $region101
    $region100: #{tpu_custom_call.1} parent=1 // pred_region
      %1115 = dma.done [#allocation18], 128
    $region101: #{tpu_custom_call.1} parent=1 // pred_fallthru
      _
    %1116 = vsyncpa [#allocation3], 1
    %1117 = vsyncpa [#allocation6], 1
    %1118 = vsyncpa [#allocation9], 1
    %1119 = vsyncpa [#allocation12], 1
    %1120 = vsyncpa [#allocation4], 1
    %1121 = vsyncpa [#allocation15], 1
    %1122 = vsyncpa [#allocation18], 1

</llo_original>
